<compile_context>
chip_gen: v7x
topology: tpu7x:2x2x1
jax: 0.10.0
libtpu: 0.0.40
codegen_flags: <defaults>
</compile_context>

<pallas_src>
import functools

import jax
import jax.numpy as jnp
from jax.experimental import pallas as pl
from jax.experimental.pallas import tpu as pltpu


def _mlp_softmax_kernel(x_ref,
                        w1_ref, b1_ref,
                        w2_ref, b2_ref,
                        w3_ref, b3_ref,
                        w4_ref, b4_ref,
                        w5_ref, b5_ref,
                        gbcast_ref,
                        out_ref,
                        *, num_bins, num_groups):
    """5 bf16 matmuls (f32 acc) + ReLU + lane-dense grouped softmax."""
    f32 = jnp.float32
    mm = w1_ref.dtype                                   # bf16 matmul inputs

    x = x_ref[...].astype(mm)                           # f32 stream -> bf16 (VPU)

    h = jnp.dot(x, w1_ref[...], preferred_element_type=f32) + b1_ref[...]
    h = jnp.maximum(h, 0.0).astype(mm)
    h = jnp.dot(h, w2_ref[...], preferred_element_type=f32) + b2_ref[...]
    h = jnp.maximum(h, 0.0).astype(mm)
    h = jnp.dot(h, w3_ref[...], preferred_element_type=f32) + b3_ref[...]
    h = jnp.maximum(h, 0.0).astype(mm)
    h = jnp.dot(h, w4_ref[...], preferred_element_type=f32) + b4_ref[...]
    h = jnp.maximum(h, 0.0).astype(mm)
    logits = jnp.dot(h, w5_ref[...], preferred_element_type=f32) + b5_ref[...]
    # logits: (TB, G*NB), lane-dense; consecutive num_bins columns are one
    # softmax group — exactly torch's .view(B, output_dim, seq_len, num_bins).

    tb = logits.shape[0]
    # One-hot grouping matrix stored bf16 in VMEM; cast once to f32 so all the
    # tiny broadcast/reduce dots are plain f32 matmuls (no mixed-dtype lowering).
    gb = gbcast_ref[...].astype(f32)                    # (G, D5)

    # Per-group max — the only narrow step.
    # TODO(synk): for very large D5 replace reshape+max and the one-hot dots
    # with a lane-dense segmented roll/max+add reduction on the XLU.
    gmax = jnp.max(logits.reshape(tb, num_groups, num_bins), axis=-1)   # (TB, G)

    # Broadcast max, reduce sum, broadcast reciprocal via one-hot matmuls on
    # the (otherwise idle) MXU so exp and the elementwise work stay 128-lane
    # dense.  One-hot weights make these exact.
    m_full = jnp.dot(gmax, gb, preferred_element_type=f32)              # (TB, D5)
    e = jnp.exp(logits - m_full)                                        # EUP, f32
    denom = jax.lax.dot_general(e, gb, (((1,), (1,)), ((), ())),
                                preferred_element_type=f32)             # (TB, G)
    r = pl.reciprocal(denom, approx=True)
    r = r * (2.0 - denom * r)                                           # one Newton step
    r_full = jnp.dot(r, gb, preferred_element_type=f32)                 # (TB, D5)

    out_ref[...] = (e * r_full).astype(out_ref.dtype)                   # lane-dense store


def mlp_action_predictor(zt, params, *, output_dim, num_bins, seq_len,
                         tile_b=None, out_dtype=jnp.float32):
    """zt: (B, seq_len, input_dim) f32 -> (B, output_dim, seq_len, num_bins)."""
    B, S, Din = zt.shape
    assert S == seq_len
    K1 = S * Din
    H = params["w1"].shape[1]
    D5 = params["w5"].shape[1]
    G = output_dim * seq_len
    assert D5 == G * num_bins
    # Note: lane-dense output store assumes D5 % 128 == 0; it still runs
    # otherwise, just with masked stores.

    x = zt.reshape(B, K1)                        # f32; bf16 cast happens in-kernel

    # One-hot group-broadcast matrix, bf16 (0/1 is exact). Only resident grouping op.
    gid = jnp.arange(D5, dtype=jnp.int32) // num_bins
    gbcast = (jnp.arange(G, dtype=jnp.int32)[:, None]
              == gid[None, :]).astype(jnp.bfloat16)                     # (G, D5)

    resident_ops = []
    for layer in range(1, 6):
        resident_ops += [params[f"w{layer}"], params[f"b{layer}"]]
    resident_ops.append(gbcast)
    resident_bytes = sum(int(a.size) * a.dtype.itemsize for a in resident_ops)

    # Per-core VMEM capacity (v5e/v6e 128 MiB, v7x 64 MiB); keep 25% headroom.
    try:
        info = pltpu.get_tpu_info()
        vmem_cap = int(getattr(info, "vmem_capacity_bytes", 64 * 1024 * 1024))
    except Exception:
        vmem_cap = 64 * 1024 * 1024
    vmem_budget = int(0.75 * vmem_cap)

    out_itemsize = jnp.dtype(out_dtype).itemsize

    def footprint(tb, resident_factor):
        streamed = 2 * tb * K1 * 4 + 2 * tb * D5 * out_itemsize   # double-buffered x / out
        interm = tb * (2 * H + 3 * D5 + 3 * G) * 4                # live f32 intermediates
        return resident_factor * resident_bytes + streamed + interm

    if tile_b is None:
        if B <= 8:
            tile_b = B                           # single full-batch block
        else:
            # >=2 grid steps when the batch allows it, capped at the MXU M dim.
            tile_b = min(256, ((pl.cdiv(B, 2) + 7) // 8) * 8)
        while tile_b > 8 and footprint(tile_b, 2) > vmem_budget:
            tile_b = max(8, ((tile_b // 2) + 7) // 8 * 8)

    grid = (pl.cdiv(B, tile_b),)

    # Advisory cost estimate for XLA's scheduler.
    flops = 2 * B * (K1 * H + 3 * H * H + H * D5 + 3 * G * D5)
    transcendentals = B * D5
    bytes_accessed = int(resident_bytes + B * K1 * 4 + B * D5 * out_itemsize)

    kernel = functools.partial(_mlp_softmax_kernel, num_bins=num_bins, num_groups=G)

    def resident_spec(a, single_buffered):
        if single_buffered:
            return pl.BlockSpec(a.shape, lambda i: (0, 0),
                                pipeline_mode=pl.Buffered(1))
        return pl.BlockSpec(a.shape, lambda i: (0, 0))

    def build(single_buffered_residents):
        in_specs = [pl.BlockSpec((tile_b, K1), lambda i: (i, 0))]
        in_specs += [resident_spec(a, single_buffered_residents) for a in resident_ops]
        rfac = 1 if single_buffered_residents else 2
        vmem_limit = int(min(max(2 * footprint(tile_b, rfac), 16 * 1024 * 1024),
                             vmem_budget))
        return pl.pallas_call(
            kernel,
            out_shape=jax.ShapeDtypeStruct((B, D5), out_dtype),
            grid=grid,
            in_specs=in_specs,
            out_specs=pl.BlockSpec((tile_b, D5), lambda i: (i, 0)),
            compiler_params=pltpu.CompilerParams(
                dimension_semantics=("parallel",),
                vmem_limit_bytes=vmem_limit),
            cost_estimate=pl.CostEstimate(flops=flops,
                                          transcendentals=transcendentals,
                                          bytes_accessed=bytes_accessed),
        )

    operands = [x] + resident_ops
    try:
        flat = build(True)(*operands)
    except Exception:
        # pipeline_mode=Buffered(1) not supported on this JAX/Pallas path:
        # fall back to default (double-buffered) residents.
        flat = build(False)(*operands)

    # Free XLA-level reshape to the PyTorch output layout.
    return flat.reshape(B, output_dim, seq_len, num_bins)


def mlp_action_predictor_ref(zt, params, *, output_dim, num_bins, seq_len):
    """Pure-JAX reference with the same bf16-matmul / f32-accumulate recipe."""
    B = zt.shape[0]
    h = zt.reshape(B, -1).astype(jnp.bfloat16)
    for i in range(1, 5):
        h = jnp.dot(h, params[f"w{i}"], preferred_element_type=jnp.float32) + params[f"b{i}"]
        h = jnp.maximum(h, 0.0).astype(jnp.bfloat16)
    logits = jnp.dot(h, params["w5"], preferred_element_type=jnp.float32) + params["b5"]
    logits = logits.reshape(B, output_dim, seq_len, num_bins)
    return jax.nn.softmax(logits, axis=-1)


def init_params(key, input_dim, hidden_dim, output_dim, num_bins, seq_len):
    """PyTorch-Linear-style U(-1/sqrt(fan_in), 1/sqrt(fan_in)) init.
    Weights stored transposed (in_features, out_features) in bf16; biases f32."""
    dims = [
        (input_dim * seq_len, hidden_dim),
        (hidden_dim, hidden_dim),
        (hidden_dim, hidden_dim),
        (hidden_dim, hidden_dim),
        (hidden_dim, output_dim * num_bins * seq_len),
    ]
    params = {}
    for i, (fan_in, fan_out) in enumerate(dims, start=1):
        key, kw, kb = jax.random.split(key, 3)
        bound = 1.0 / (float(fan_in) ** 0.5)
        params[f"w{i}"] = jax.random.uniform(
            kw, (fan_in, fan_out), jnp.float32, -bound, bound).astype(jnp.bfloat16)
        params[f"b{i}"] = jax.random.uniform(
            kb, (1, fan_out), jnp.float32, -bound, bound)
    return params


def pad_params_for_tpu(params, multiple=128):
    """Zero-pad the hidden dimension to a multiple of 128 so the middle matmuls
    run with full MXU lanes.  Mathematically exact: padded columns get zero
    weight + zero bias, ReLU(0)=0, and padded rows multiply exact zeros."""
    H = params["w2"].shape[0]
    Hp = ((H + multiple - 1) // multiple) * multiple
    if Hp == H:
        return params
    d = Hp - H
    out = dict(params)
    out["w1"] = jnp.pad(params["w1"], ((0, 0), (0, d)))
    out["b1"] = jnp.pad(params["b1"], ((0, 0), (0, d)))
    for i in (2, 3, 4):
        out[f"w{i}"] = jnp.pad(params[f"w{i}"], ((0, d), (0, d)))
        out[f"b{i}"] = jnp.pad(params[f"b{i}"], ((0, 0), (0, d)))
    out["w5"] = jnp.pad(params["w5"], ((0, d), (0, 0)))
    return out


if __name__ == "__main__":
    B, input_dim, hidden_dim, output_dim, num_bins, seq_len = 2, 4, 32, 2, 16, 8

    key = jax.random.PRNGKey(0)
    key, kx = jax.random.split(key)
    zt = jax.random.normal(kx, (B, seq_len, input_dim), jnp.float32)
    params = init_params(key, input_dim, hidden_dim, output_dim, num_bins, seq_len)
    params = pad_params_for_tpu(params)   # exact; fills MXU lanes for hidden matmuls

    h_hat = mlp_action_predictor(
        zt, params, output_dim=output_dim, num_bins=num_bins, seq_len=seq_len)
    h_hat = jax.block_until_ready(h_hat)

    assert h_hat.shape == (B, output_dim, seq_len, num_bins)
    assert bool(jnp.all(jnp.isfinite(h_hat)))
    # softmax rows sum to 1
    assert bool(jnp.allclose(jnp.sum(h_hat, axis=-1), 1.0, atol=1e-4))
    # matches the pure-JAX reference
    ref = mlp_action_predictor_ref(zt, params, output_dim=output_dim,
                                   num_bins=num_bins, seq_len=seq_len)
    assert bool(jnp.allclose(h_hat, ref, atol=2e-3))
    print("KERNEL_OK")
</pallas_src>

<mosaic_0001>
module attributes {stable_mosaic.version = 11 : i64} {
  func.func @_mlp_softmax_kernel(%arg0: i32, %arg1: memref<2x32xf32, #tpu.memory_space<vmem>>, %arg2: memref<32x128xbf16, #tpu.memory_space<vmem>>, %arg3: memref<1x128xf32, #tpu.memory_space<vmem>>, %arg4: memref<128x128xbf16, #tpu.memory_space<vmem>>, %arg5: memref<1x128xf32, #tpu.memory_space<vmem>>, %arg6: memref<128x128xbf16, #tpu.memory_space<vmem>>, %arg7: memref<1x128xf32, #tpu.memory_space<vmem>>, %arg8: memref<128x128xbf16, #tpu.memory_space<vmem>>, %arg9: memref<1x128xf32, #tpu.memory_space<vmem>>, %arg10: memref<128x256xbf16, #tpu.memory_space<vmem>>, %arg11: memref<1x256xf32, #tpu.memory_space<vmem>>, %arg12: memref<16x256xbf16, #tpu.memory_space<vmem>>, %arg13: memref<2x256xf32, #tpu.memory_space<vmem>>) attributes {dimension_semantics = [#tpu.dimension_semantics<parallel>], iteration_bounds = array<i64: 1>, scalar_prefetch = 0 : i64, scratch_operands = 0 : i64, tpu.core_type = #tpu.core_type<tc>, window_params = [{transform_indices = @transform_0, window_bounds = array<i64: 2, 32>}, {pipeline_mode = #tpu.pipeline_mode<synchronous>, transform_indices = @transform_1, window_bounds = array<i64: 32, 128>}, {pipeline_mode = #tpu.pipeline_mode<synchronous>, transform_indices = @transform_2, window_bounds = array<i64: 1, 128>}, {pipeline_mode = #tpu.pipeline_mode<synchronous>, transform_indices = @transform_3, window_bounds = array<i64: 128, 128>}, {pipeline_mode = #tpu.pipeline_mode<synchronous>, transform_indices = @transform_4, window_bounds = array<i64: 1, 128>}, {pipeline_mode = #tpu.pipeline_mode<synchronous>, transform_indices = @transform_5, window_bounds = array<i64: 128, 128>}, {pipeline_mode = #tpu.pipeline_mode<synchronous>, transform_indices = @transform_6, window_bounds = array<i64: 1, 128>}, {pipeline_mode = #tpu.pipeline_mode<synchronous>, transform_indices = @transform_7, window_bounds = array<i64: 128, 128>}, {pipeline_mode = #tpu.pipeline_mode<synchronous>, transform_indices = @transform_8, window_bounds = array<i64: 1, 128>}, {pipeline_mode = #tpu.pipeline_mode<synchronous>, transform_indices = @transform_9, window_bounds = array<i64: 128, 256>}, {pipeline_mode = #tpu.pipeline_mode<synchronous>, transform_indices = @transform_10, window_bounds = array<i64: 1, 256>}, {pipeline_mode = #tpu.pipeline_mode<synchronous>, transform_indices = @transform_11, window_bounds = array<i64: 16, 256>}, {transform_indices = @transform_12, window_bounds = array<i64: 2, 256>}]} {
    %c0 = arith.constant 0 : index
    %c0_0 = arith.constant 0 : index
    %0 = vector.load %arg1[%c0, %c0_0] : memref<2x32xf32, #tpu.memory_space<vmem>>, vector<2x32xf32>
    %1 = arith.truncf %0 : vector<2x32xf32> to vector<2x32xbf16>
    %c0_1 = arith.constant 0 : index
    %c0_2 = arith.constant 0 : index
    %2 = vector.load %arg2[%c0_1, %c0_2] : memref<32x128xbf16, #tpu.memory_space<vmem>>, vector<32x128xbf16>
    %cst = arith.constant dense<0.000000e+00> : vector<2x128xf32>
    %3 = tpu.matmul %1, %2, %cst {dimension_numbers = #tpu.dot_dimension_numbers<[1], [0], [0], [1], [0, 0, 1, 1], [], []>} : vector<2x32xbf16>, vector<32x128xbf16>, vector<2x128xf32> -> vector<2x128xf32>
    %c0_3 = arith.constant 0 : index
    %c0_4 = arith.constant 0 : index
    %4 = vector.load %arg3[%c0_3, %c0_4] : memref<1x128xf32, #tpu.memory_space<vmem>>, vector<1x128xf32>
    %5 = vector.broadcast %4 : vector<1x128xf32> to vector<2x128xf32>
    %6 = arith.addf %3, %5 : vector<2x128xf32>
    %cst_5 = arith.constant 0.000000e+00 : f32
    %7 = vector.broadcast %cst_5 : f32 to vector<2x128xf32>
    %8 = arith.maximumf %6, %7 : vector<2x128xf32>
    %9 = arith.truncf %8 : vector<2x128xf32> to vector<2x128xbf16>
    %c0_6 = arith.constant 0 : index
    %c0_7 = arith.constant 0 : index
    %10 = vector.load %arg4[%c0_6, %c0_7] : memref<128x128xbf16, #tpu.memory_space<vmem>>, vector<128x128xbf16>
    %cst_8 = arith.constant dense<0.000000e+00> : vector<2x128xf32>
    %11 = tpu.matmul %9, %10, %cst_8 {dimension_numbers = #tpu.dot_dimension_numbers<[1], [0], [0], [1], [0, 0, 1, 1], [], []>} : vector<2x128xbf16>, vector<128x128xbf16>, vector<2x128xf32> -> vector<2x128xf32>
    %c0_9 = arith.constant 0 : index
    %c0_10 = arith.constant 0 : index
    %12 = vector.load %arg5[%c0_9, %c0_10] : memref<1x128xf32, #tpu.memory_space<vmem>>, vector<1x128xf32>
    %13 = vector.broadcast %12 : vector<1x128xf32> to vector<2x128xf32>
    %14 = arith.addf %11, %13 : vector<2x128xf32>
    %cst_11 = arith.constant 0.000000e+00 : f32
    %15 = vector.broadcast %cst_11 : f32 to vector<2x128xf32>
    %16 = arith.maximumf %14, %15 : vector<2x128xf32>
    %17 = arith.truncf %16 : vector<2x128xf32> to vector<2x128xbf16>
    %c0_12 = arith.constant 0 : index
    %c0_13 = arith.constant 0 : index
    %18 = vector.load %arg6[%c0_12, %c0_13] : memref<128x128xbf16, #tpu.memory_space<vmem>>, vector<128x128xbf16>
    %cst_14 = arith.constant dense<0.000000e+00> : vector<2x128xf32>
    %19 = tpu.matmul %17, %18, %cst_14 {dimension_numbers = #tpu.dot_dimension_numbers<[1], [0], [0], [1], [0, 0, 1, 1], [], []>} : vector<2x128xbf16>, vector<128x128xbf16>, vector<2x128xf32> -> vector<2x128xf32>
    %c0_15 = arith.constant 0 : index
    %c0_16 = arith.constant 0 : index
    %20 = vector.load %arg7[%c0_15, %c0_16] : memref<1x128xf32, #tpu.memory_space<vmem>>, vector<1x128xf32>
    %21 = vector.broadcast %20 : vector<1x128xf32> to vector<2x128xf32>
    %22 = arith.addf %19, %21 : vector<2x128xf32>
    %cst_17 = arith.constant 0.000000e+00 : f32
    %23 = vector.broadcast %cst_17 : f32 to vector<2x128xf32>
    %24 = arith.maximumf %22, %23 : vector<2x128xf32>
    %25 = arith.truncf %24 : vector<2x128xf32> to vector<2x128xbf16>
    %c0_18 = arith.constant 0 : index
    %c0_19 = arith.constant 0 : index
    %26 = vector.load %arg8[%c0_18, %c0_19] : memref<128x128xbf16, #tpu.memory_space<vmem>>, vector<128x128xbf16>
    %cst_20 = arith.constant dense<0.000000e+00> : vector<2x128xf32>
    %27 = tpu.matmul %25, %26, %cst_20 {dimension_numbers = #tpu.dot_dimension_numbers<[1], [0], [0], [1], [0, 0, 1, 1], [], []>} : vector<2x128xbf16>, vector<128x128xbf16>, vector<2x128xf32> -> vector<2x128xf32>
    %c0_21 = arith.constant 0 : index
    %c0_22 = arith.constant 0 : index
    %28 = vector.load %arg9[%c0_21, %c0_22] : memref<1x128xf32, #tpu.memory_space<vmem>>, vector<1x128xf32>
    %29 = vector.broadcast %28 : vector<1x128xf32> to vector<2x128xf32>
    %30 = arith.addf %27, %29 : vector<2x128xf32>
    %cst_23 = arith.constant 0.000000e+00 : f32
    %31 = vector.broadcast %cst_23 : f32 to vector<2x128xf32>
    %32 = arith.maximumf %30, %31 : vector<2x128xf32>
    %33 = arith.truncf %32 : vector<2x128xf32> to vector<2x128xbf16>
    %c0_24 = arith.constant 0 : index
    %c0_25 = arith.constant 0 : index
    %34 = vector.load %arg10[%c0_24, %c0_25] : memref<128x256xbf16, #tpu.memory_space<vmem>>, vector<128x256xbf16>
    %cst_26 = arith.constant dense<0.000000e+00> : vector<2x256xf32>
    %35 = tpu.matmul %33, %34, %cst_26 {dimension_numbers = #tpu.dot_dimension_numbers<[1], [0], [0], [1], [0, 0, 1, 1], [], []>} : vector<2x128xbf16>, vector<128x256xbf16>, vector<2x256xf32> -> vector<2x256xf32>
    %c0_27 = arith.constant 0 : index
    %c0_28 = arith.constant 0 : index
    %36 = vector.load %arg11[%c0_27, %c0_28] : memref<1x256xf32, #tpu.memory_space<vmem>>, vector<1x256xf32>
    %37 = vector.broadcast %36 : vector<1x256xf32> to vector<2x256xf32>
    %38 = arith.addf %35, %37 : vector<2x256xf32>
    %c0_29 = arith.constant 0 : index
    %c0_30 = arith.constant 0 : index
    %39 = vector.load %arg12[%c0_29, %c0_30] : memref<16x256xbf16, #tpu.memory_space<vmem>>, vector<16x256xbf16>
    %40 = arith.extf %39 : vector<16x256xbf16> to vector<16x256xf32>
    %41 = vector.shape_cast %38 : vector<2x256xf32> to vector<2x16x16xf32>
    %cst_31 = arith.constant dense<0xFF800000> : vector<2x16xf32>
    %42 = vector.multi_reduction <maximumf>, %41, %cst_31 [2] : vector<2x16x16xf32> to vector<2x16xf32>
    %cst_32 = arith.constant dense<0.000000e+00> : vector<2x256xf32>
    %43 = tpu.matmul %42, %40, %cst_32 {dimension_numbers = #tpu.dot_dimension_numbers<[1], [0], [0], [1], [0, 0, 1, 1], [], []>} : vector<2x16xf32>, vector<16x256xf32>, vector<2x256xf32> -> vector<2x256xf32>
    %44 = arith.subf %38, %43 : vector<2x256xf32>
    %45 = math.exp %44 : vector<2x256xf32>
    %cst_33 = arith.constant dense<0.000000e+00> : vector<2x16xf32>
    %46 = tpu.matmul %45, %40, %cst_33 {dimension_numbers = #tpu.dot_dimension_numbers<[1], [1], [0], [0], [0, 0, 1, 0], [], []>} : vector<2x256xf32>, vector<16x256xf32>, vector<2x16xf32> -> vector<2x16xf32>
    %47 = tpu.reciprocal %46 {approx = true} : vector<2x16xf32> -> vector<2x16xf32>
    %48 = arith.mulf %46, %47 : vector<2x16xf32>
    %cst_34 = arith.constant 2.000000e+00 : f32
    %49 = vector.broadcast %cst_34 : f32 to vector<2x16xf32>
    %50 = arith.subf %49, %48 : vector<2x16xf32>
    %51 = arith.mulf %47, %50 : vector<2x16xf32>
    %cst_35 = arith.constant dense<0.000000e+00> : vector<2x256xf32>
    %52 = tpu.matmul %51, %40, %cst_35 {dimension_numbers = #tpu.dot_dimension_numbers<[1], [0], [0], [1], [0, 0, 1, 1], [], []>} : vector<2x16xf32>, vector<16x256xf32>, vector<2x256xf32> -> vector<2x256xf32>
    %53 = arith.mulf %45, %52 : vector<2x256xf32>
    %c0_36 = arith.constant 0 : index
    %c0_37 = arith.constant 0 : index
    %54 = vector.load %arg13[%c0_36, %c0_37] : memref<2x256xf32, #tpu.memory_space<vmem>>, vector<2x256xf32>
    tpu.vector_store %arg13[%c0_36, %c0_37], %53 {strides = array<i32>} : memref<2x256xf32, #tpu.memory_space<vmem>>, vector<2x256xf32>,
    return
  }
  func.func @transform_0(%arg0: i32) -> (i32, i32) {
    %c0_i32 = arith.constant 0 : i32
    %c0_i32_0 = arith.constant 0 : i32
    return %arg0, %c0_i32 : i32, i32
  }
  func.func @transform_1(%arg0: i32) -> (i32, i32) {
    %c0_i32 = arith.constant 0 : i32
    %c0_i32_0 = arith.constant 0 : i32
    %c0_i32_1 = arith.constant 0 : i32
    return %c0_i32, %c0_i32_0 : i32, i32
  }
  func.func @transform_2(%arg0: i32) -> (i32, i32) {
    %c0_i32 = arith.constant 0 : i32
    %c0_i32_0 = arith.constant 0 : i32
    %c0_i32_1 = arith.constant 0 : i32
    return %c0_i32, %c0_i32_0 : i32, i32
  }
  func.func @transform_3(%arg0: i32) -> (i32, i32) {
    %c0_i32 = arith.constant 0 : i32
    %c0_i32_0 = arith.constant 0 : i32
    %c0_i32_1 = arith.constant 0 : i32
    return %c0_i32, %c0_i32_0 : i32, i32
  }
  func.func @transform_4(%arg0: i32) -> (i32, i32) {
    %c0_i32 = arith.constant 0 : i32
    %c0_i32_0 = arith.constant 0 : i32
    %c0_i32_1 = arith.constant 0 : i32
    return %c0_i32, %c0_i32_0 : i32, i32
  }
  func.func @transform_5(%arg0: i32) -> (i32, i32) {
    %c0_i32 = arith.constant 0 : i32
    %c0_i32_0 = arith.constant 0 : i32
    %c0_i32_1 = arith.constant 0 : i32
    return %c0_i32, %c0_i32_0 : i32, i32
  }
  func.func @transform_6(%arg0: i32) -> (i32, i32) {
    %c0_i32 = arith.constant 0 : i32
    %c0_i32_0 = arith.constant 0 : i32
    %c0_i32_1 = arith.constant 0 : i32
    return %c0_i32, %c0_i32_0 : i32, i32
  }
  func.func @transform_7(%arg0: i32) -> (i32, i32) {
    %c0_i32 = arith.constant 0 : i32
    %c0_i32_0 = arith.constant 0 : i32
    %c0_i32_1 = arith.constant 0 : i32
    return %c0_i32, %c0_i32_0 : i32, i32
  }
  func.func @transform_8(%arg0: i32) -> (i32, i32) {
    %c0_i32 = arith.constant 0 : i32
    %c0_i32_0 = arith.constant 0 : i32
    %c0_i32_1 = arith.constant 0 : i32
    return %c0_i32, %c0_i32_0 : i32, i32
  }
  func.func @transform_9(%arg0: i32) -> (i32, i32) {
    %c0_i32 = arith.constant 0 : i32
    %c0_i32_0 = arith.constant 0 : i32
    %c0_i32_1 = arith.constant 0 : i32
    return %c0_i32, %c0_i32_0 : i32, i32
  }
  func.func @transform_10(%arg0: i32) -> (i32, i32) {
    %c0_i32 = arith.constant 0 : i32
    %c0_i32_0 = arith.constant 0 : i32
    %c0_i32_1 = arith.constant 0 : i32
    return %c0_i32, %c0_i32_0 : i32, i32
  }
  func.func @transform_11(%arg0: i32) -> (i32, i32) {
    %c0_i32 = arith.constant 0 : i32
    %c0_i32_0 = arith.constant 0 : i32
    %c0_i32_1 = arith.constant 0 : i32
    return %c0_i32, %c0_i32_0 : i32, i32
  }
  func.func @transform_12(%arg0: i32) -> (i32, i32) {
    %c0_i32 = arith.constant 0 : i32
    %c0_i32_0 = arith.constant 0 : i32
    return %arg0, %c0_i32 : i32, i32
  }
}

module attributes {stable_mosaic.version = 11 : i64} {
  func.func @_mlp_softmax_kernel(%arg0: i32, %arg1: memref<2x32xf32, #tpu.memory_space<vmem>>, %arg2: memref<32x128xbf16, #tpu.memory_space<vmem>>, %arg3: memref<1x128xf32, #tpu.memory_space<vmem>>, %arg4: memref<128x128xbf16, #tpu.memory_space<vmem>>, %arg5: memref<1x128xf32, #tpu.memory_space<vmem>>, %arg6: memref<128x128xbf16, #tpu.memory_space<vmem>>, %arg7: memref<1x128xf32, #tpu.memory_space<vmem>>, %arg8: memref<128x128xbf16, #tpu.memory_space<vmem>>, %arg9: memref<1x128xf32, #tpu.memory_space<vmem>>, %arg10: memref<128x256xbf16, #tpu.memory_space<vmem>>, %arg11: memref<1x256xf32, #tpu.memory_space<vmem>>, %arg12: memref<16x256xbf16, #tpu.memory_space<vmem>>, %arg13: memref<2x256xf32, #tpu.memory_space<vmem>>) attributes {dimension_semantics = [#tpu.dimension_semantics<parallel>], iteration_bounds = array<i64: 1>, scalar_prefetch = 0 : i64, scratch_operands = 0 : i64, tpu.core_type = #tpu.core_type<tc>, window_params = [{transform_indices = @transform_0, window_bounds = array<i64: 2, 32>}, {pipeline_mode = #tpu.pipeline_mode<synchronous>, transform_indices = @transform_1, window_bounds = array<i64: 32, 128>}, {pipeline_mode = #tpu.pipeline_mode<synchronous>, transform_indices = @transform_2, window_bounds = array<i64: 1, 128>}, {pipeline_mode = #tpu.pipeline_mode<synchronous>, transform_indices = @transform_3, window_bounds = array<i64: 128, 128>}, {pipeline_mode = #tpu.pipeline_mode<synchronous>, transform_indices = @transform_4, window_bounds = array<i64: 1, 128>}, {pipeline_mode = #tpu.pipeline_mode<synchronous>, transform_indices = @transform_5, window_bounds = array<i64: 128, 128>}, {pipeline_mode = #tpu.pipeline_mode<synchronous>, transform_indices = @transform_6, window_bounds = array<i64: 1, 128>}, {pipeline_mode = #tpu.pipeline_mode<synchronous>, transform_indices = @transform_7, window_bounds = array<i64: 128, 128>}, {pipeline_mode = #tpu.pipeline_mode<synchronous>, transform_indices = @transform_8, window_bounds = array<i64: 1, 128>}, {pipeline_mode = #tpu.pipeline_mode<synchronous>, transform_indices = @transform_9, window_bounds = array<i64: 128, 256>}, {pipeline_mode = #tpu.pipeline_mode<synchronous>, transform_indices = @transform_10, window_bounds = array<i64: 1, 256>}, {pipeline_mode = #tpu.pipeline_mode<synchronous>, transform_indices = @transform_11, window_bounds = array<i64: 16, 256>}, {transform_indices = @transform_12, window_bounds = array<i64: 2, 256>}]} {
    %c0 = arith.constant 0 : index
    %c0_0 = arith.constant 0 : index
    %0 = vector.load %arg1[%c0, %c0_0] : memref<2x32xf32, #tpu.memory_space<vmem>>, vector<2x32xf32>
    %1 = arith.truncf %0 : vector<2x32xf32> to vector<2x32xbf16>
    %c0_1 = arith.constant 0 : index
    %c0_2 = arith.constant 0 : index
    %2 = vector.load %arg2[%c0_1, %c0_2] : memref<32x128xbf16, #tpu.memory_space<vmem>>, vector<32x128xbf16>
    %cst = arith.constant dense<0.000000e+00> : vector<2x128xf32>
    %3 = tpu.matmul %1, %2, %cst {dimension_numbers = #tpu.dot_dimension_numbers<[1], [0], [0], [1], [0, 0, 1, 1], [], []>} : vector<2x32xbf16>, vector<32x128xbf16>, vector<2x128xf32> -> vector<2x128xf32>
    %c0_3 = arith.constant 0 : index
    %c0_4 = arith.constant 0 : index
    %4 = vector.load %arg3[%c0_3, %c0_4] : memref<1x128xf32, #tpu.memory_space<vmem>>, vector<1x128xf32>
    %5 = vector.broadcast %4 : vector<1x128xf32> to vector<2x128xf32>
    %6 = arith.addf %3, %5 : vector<2x128xf32>
    %cst_5 = arith.constant 0.000000e+00 : f32
    %7 = vector.broadcast %cst_5 : f32 to vector<2x128xf32>
    %8 = arith.maximumf %6, %7 : vector<2x128xf32>
    %9 = arith.truncf %8 : vector<2x128xf32> to vector<2x128xbf16>
    %c0_6 = arith.constant 0 : index
    %c0_7 = arith.constant 0 : index
    %10 = vector.load %arg4[%c0_6, %c0_7] : memref<128x128xbf16, #tpu.memory_space<vmem>>, vector<128x128xbf16>
    %cst_8 = arith.constant dense<0.000000e+00> : vector<2x128xf32>
    %11 = tpu.matmul %9, %10, %cst_8 {dimension_numbers = #tpu.dot_dimension_numbers<[1], [0], [0], [1], [0, 0, 1, 1], [], []>} : vector<2x128xbf16>, vector<128x128xbf16>, vector<2x128xf32> -> vector<2x128xf32>
    %c0_9 = arith.constant 0 : index
    %c0_10 = arith.constant 0 : index
    %12 = vector.load %arg5[%c0_9, %c0_10] : memref<1x128xf32, #tpu.memory_space<vmem>>, vector<1x128xf32>
    %13 = vector.broadcast %12 : vector<1x128xf32> to vector<2x128xf32>
    %14 = arith.addf %11, %13 : vector<2x128xf32>
    %cst_11 = arith.constant 0.000000e+00 : f32
    %15 = vector.broadcast %cst_11 : f32 to vector<2x128xf32>
    %16 = arith.maximumf %14, %15 : vector<2x128xf32>
    %17 = arith.truncf %16 : vector<2x128xf32> to vector<2x128xbf16>
    %c0_12 = arith.constant 0 : index
    %c0_13 = arith.constant 0 : index
    %18 = vector.load %arg6[%c0_12, %c0_13] : memref<128x128xbf16, #tpu.memory_space<vmem>>, vector<128x128xbf16>
    %cst_14 = arith.constant dense<0.000000e+00> : vector<2x128xf32>
    %19 = tpu.matmul %17, %18, %cst_14 {dimension_numbers = #tpu.dot_dimension_numbers<[1], [0], [0], [1], [0, 0, 1, 1], [], []>} : vector<2x128xbf16>, vector<128x128xbf16>, vector<2x128xf32> -> vector<2x128xf32>
    %c0_15 = arith.constant 0 : index
    %c0_16 = arith.constant 0 : index
    %20 = vector.load %arg7[%c0_15, %c0_16] : memref<1x128xf32, #tpu.memory_space<vmem>>, vector<1x128xf32>
    %21 = vector.broadcast %20 : vector<1x128xf32> to vector<2x128xf32>
    %22 = arith.addf %19, %21 : vector<2x128xf32>
    %cst_17 = arith.constant 0.000000e+00 : f32
    %23 = vector.broadcast %cst_17 : f32 to vector<2x128xf32>
    %24 = arith.maximumf %22, %23 : vector<2x128xf32>
    %25 = arith.truncf %24 : vector<2x128xf32> to vector<2x128xbf16>
    %c0_18 = arith.constant 0 : index
    %c0_19 = arith.constant 0 : index
    %26 = vector.load %arg8[%c0_18, %c0_19] : memref<128x128xbf16, #tpu.memory_space<vmem>>, vector<128x128xbf16>
    %cst_20 = arith.constant dense<0.000000e+00> : vector<2x128xf32>
    %27 = tpu.matmul %25, %26, %cst_20 {dimension_numbers = #tpu.dot_dimension_numbers<[1], [0], [0], [1], [0, 0, 1, 1], [], []>} : vector<2x128xbf16>, vector<128x128xbf16>, vector<2x128xf32> -> vector<2x128xf32>
    %c0_21 = arith.constant 0 : index
    %c0_22 = arith.constant 0 : index
    %28 = vector.load %arg9[%c0_21, %c0_22] : memref<1x128xf32, #tpu.memory_space<vmem>>, vector<1x128xf32>
    %29 = vector.broadcast %28 : vector<1x128xf32> to vector<2x128xf32>
    %30 = arith.addf %27, %29 : vector<2x128xf32>
    %cst_23 = arith.constant 0.000000e+00 : f32
    %31 = vector.broadcast %cst_23 : f32 to vector<2x128xf32>
    %32 = arith.maximumf %30, %31 : vector<2x128xf32>
    %33 = arith.truncf %32 : vector<2x128xf32> to vector<2x128xbf16>
    %c0_24 = arith.constant 0 : index
    %c0_25 = arith.constant 0 : index
    %34 = vector.load %arg10[%c0_24, %c0_25] : memref<128x256xbf16, #tpu.memory_space<vmem>>, vector<128x256xbf16>
    %cst_26 = arith.constant dense<0.000000e+00> : vector<2x256xf32>
    %35 = tpu.matmul %33, %34, %cst_26 {dimension_numbers = #tpu.dot_dimension_numbers<[1], [0], [0], [1], [0, 0, 1, 1], [], []>} : vector<2x128xbf16>, vector<128x256xbf16>, vector<2x256xf32> -> vector<2x256xf32>
    %c0_27 = arith.constant 0 : index
    %c0_28 = arith.constant 0 : index
    %36 = vector.load %arg11[%c0_27, %c0_28] : memref<1x256xf32, #tpu.memory_space<vmem>>, vector<1x256xf32>
    %37 = vector.broadcast %36 : vector<1x256xf32> to vector<2x256xf32>
    %38 = arith.addf %35, %37 : vector<2x256xf32>
    %c0_29 = arith.constant 0 : index
    %c0_30 = arith.constant 0 : index
    %39 = vector.load %arg12[%c0_29, %c0_30] : memref<16x256xbf16, #tpu.memory_space<vmem>>, vector<16x256xbf16>
    %40 = arith.extf %39 : vector<16x256xbf16> to vector<16x256xf32>
    %41 = vector.shape_cast %38 : vector<2x256xf32> to vector<2x16x16xf32>
    %cst_31 = arith.constant dense<0xFF800000> : vector<2x16xf32>
    %42 = vector.multi_reduction <maximumf>, %41, %cst_31 [2] : vector<2x16x16xf32> to vector<2x16xf32>
    %cst_32 = arith.constant dense<0.000000e+00> : vector<2x256xf32>
    %43 = tpu.matmul %42, %40, %cst_32 {dimension_numbers = #tpu.dot_dimension_numbers<[1], [0], [0], [1], [0, 0, 1, 1], [], []>} : vector<2x16xf32>, vector<16x256xf32>, vector<2x256xf32> -> vector<2x256xf32>
    %44 = arith.subf %38, %43 : vector<2x256xf32>
    %45 = math.exp %44 : vector<2x256xf32>
    %cst_33 = arith.constant dense<0.000000e+00> : vector<2x16xf32>
    %46 = tpu.matmul %45, %40, %cst_33 {dimension_numbers = #tpu.dot_dimension_numbers<[1], [1], [0], [0], [0, 0, 1, 0], [], []>} : vector<2x256xf32>, vector<16x256xf32>, vector<2x16xf32> -> vector<2x16xf32>
    %47 = tpu.reciprocal %46 {approx = true} : vector<2x16xf32> -> vector<2x16xf32>
    %48 = arith.mulf %46, %47 : vector<2x16xf32>
    %cst_34 = arith.constant 2.000000e+00 : f32
    %49 = vector.broadcast %cst_34 : f32 to vector<2x16xf32>
    %50 = arith.subf %49, %48 : vector<2x16xf32>
    %51 = arith.mulf %47, %50 : vector<2x16xf32>
    %cst_35 = arith.constant dense<0.000000e+00> : vector<2x256xf32>
    %52 = tpu.matmul %51, %40, %cst_35 {dimension_numbers = #tpu.dot_dimension_numbers<[1], [0], [0], [1], [0, 0, 1, 1], [], []>} : vector<2x16xf32>, vector<16x256xf32>, vector<2x256xf32> -> vector<2x256xf32>
    %53 = arith.mulf %45, %52 : vector<2x256xf32>
    %c0_36 = arith.constant 0 : index
    %c0_37 = arith.constant 0 : index
    %54 = vector.load %arg13[%c0_36, %c0_37] : memref<2x256xf32, #tpu.memory_space<vmem>>, vector<2x256xf32>
    tpu.vector_store %arg13[%c0_36, %c0_37], %53 {strides = array<i32>} : memref<2x256xf32, #tpu.memory_space<vmem>>, vector<2x256xf32>,
    return
  }
  func.func @transform_0(%arg0: i32) -> (i32, i32) {
    %c0_i32 = arith.constant 0 : i32
    %c0_i32_0 = arith.constant 0 : i32
    return %arg0, %c0_i32 : i32, i32
  }
  func.func @transform_1(%arg0: i32) -> (i32, i32) {
    %c0_i32 = arith.constant 0 : i32
    %c0_i32_0 = arith.constant 0 : i32
    %c0_i32_1 = arith.constant 0 : i32
    return %c0_i32, %c0_i32_0 : i32, i32
  }
  func.func @transform_2(%arg0: i32) -> (i32, i32) {
    %c0_i32 = arith.constant 0 : i32
    %c0_i32_0 = arith.constant 0 : i32
    %c0_i32_1 = arith.constant 0 : i32
    return %c0_i32, %c0_i32_0 : i32, i32
  }
  func.func @transform_3(%arg0: i32) -> (i32, i32) {
    %c0_i32 = arith.constant 0 : i32
    %c0_i32_0 = arith.constant 0 : i32
    %c0_i32_1 = arith.constant 0 : i32
    return %c0_i32, %c0_i32_0 : i32, i32
  }
  func.func @transform_4(%arg0: i32) -> (i32, i32) {
    %c0_i32 = arith.constant 0 : i32
    %c0_i32_0 = arith.constant 0 : i32
    %c0_i32_1 = arith.constant 0 : i32
    return %c0_i32, %c0_i32_0 : i32, i32
  }
  func.func @transform_5(%arg0: i32) -> (i32, i32) {
    %c0_i32 = arith.constant 0 : i32
    %c0_i32_0 = arith.constant 0 : i32
    %c0_i32_1 = arith.constant 0 : i32
    return %c0_i32, %c0_i32_0 : i32, i32
  }
  func.func @transform_6(%arg0: i32) -> (i32, i32) {
    %c0_i32 = arith.constant 0 : i32
    %c0_i32_0 = arith.constant 0 : i32
    %c0_i32_1 = arith.constant 0 : i32
    return %c0_i32, %c0_i32_0 : i32, i32
  }
  func.func @transform_7(%arg0: i32) -> (i32, i32) {
    %c0_i32 = arith.constant 0 : i32
    %c0_i32_0 = arith.constant 0 : i32
    %c0_i32_1 = arith.constant 0 : i32
    return %c0_i32, %c0_i32_0 : i32, i32
  }
  func.func @transform_8(%arg0: i32) -> (i32, i32) {
    %c0_i32 = arith.constant 0 : i32
    %c0_i32_0 = arith.constant 0 : i32
    %c0_i32_1 = arith.constant 0 : i32
    return %c0_i32, %c0_i32_0 : i32, i32
  }
  func.func @transform_9(%arg0: i32) -> (i32, i32) {
    %c0_i32 = arith.constant 0 : i32
    %c0_i32_0 = arith.constant 0 : i32
    %c0_i32_1 = arith.constant 0 : i32
    return %c0_i32, %c0_i32_0 : i32, i32
  }
  func.func @transform_10(%arg0: i32) -> (i32, i32) {
    %c0_i32 = arith.constant 0 : i32
    %c0_i32_0 = arith.constant 0 : i32
    %c0_i32_1 = arith.constant 0 : i32
    return %c0_i32, %c0_i32_0 : i32, i32
  }
  func.func @transform_11(%arg0: i32) -> (i32, i32) {
    %c0_i32 = arith.constant 0 : i32
    %c0_i32_0 = arith.constant 0 : i32
    %c0_i32_1 = arith.constant 0 : i32
    return %c0_i32, %c0_i32_0 : i32, i32
  }
  func.func @transform_12(%arg0: i32) -> (i32, i32) {
    %c0_i32 = arith.constant 0 : i32
    %c0_i32_0 = arith.constant 0 : i32
    return %arg0, %c0_i32 : i32, i32
  }
}

</mosaic_0001>

<llo_original>
// kernel: tpu_custom_call.1
$region0: #{tpu_custom_call.1}
  #allocation0 [shape = 'u32[]', space=smem, size = 0x4, offset = 0x4, fixed_abs, tag = 'smem constant byte address 0x4 - core index']
  #allocation1 [shape = 'u32[144,128]{1,0:T(1,128)}', space=vmem, size = 0x12000, scoped, tag = 'internal scratch']
  %s0 = inlined_call_operand.hbm [shape: f32[2,32], index: 0, kind: input, shape index: {}]
  %s1 = inlined_call_operand.hbm [shape: bf16[32,128], index: 1, kind: input, shape index: {}]
  %s2 = inlined_call_operand.vmem [shape: f32[1,128], index: 2, kind: input, shape index: {}]
  %s3 = inlined_call_operand.hbm [shape: bf16[128,128], index: 3, kind: input, shape index: {}]
  %s4 = inlined_call_operand.vmem [shape: f32[1,128], index: 4, kind: input, shape index: {}]
  %s5 = inlined_call_operand.hbm [shape: bf16[128,128], index: 5, kind: input, shape index: {}]
  %s6 = inlined_call_operand.vmem [shape: f32[1,128], index: 6, kind: input, shape index: {}]
  %s7 = inlined_call_operand.hbm [shape: bf16[128,128], index: 7, kind: input, shape index: {}]
  %s8 = inlined_call_operand.vmem [shape: f32[1,128], index: 8, kind: input, shape index: {}]
  %s9 = inlined_call_operand.hbm [shape: bf16[128,256], index: 9, kind: input, shape index: {}]
  %s10 = inlined_call_operand.vmem [shape: f32[1,256], index: 10, kind: input, shape index: {}]
  %s11 = inlined_call_operand.vmem [shape: bf16[16,256], index: 11, kind: input, shape index: {}]
  %s12 = inlined_call_operand.hbm [shape: f32[2,256], index: 12, kind: output, shape index: {}]
  %s13 = sld [smem:[#allocation0]]
  $region82: #{tpu_custom_call.1} parent=0
    _
  %s15 = ssub.s32 1, %s13
  %s16 = scalar_select 0, %s15, %s13
  $region1: #{tpu_custom_call.1} parent=0
    #allocation2 [shape = 'u8[1024]{0}', space=vmem, size = 0x400, scoped, tag = 'input window, operand 0, single buffered']
    #allocation3 [shape = 's32[1]{0}', space=sflag, size = 0x4, scoped, tag = 'scoped memory for tpu_custom_call.1']
    #allocation4 [shape = 's32[1]{0}', space=sflag, size = 0x4, scoped, tag = 'scoped memory for tpu_custom_call.1']
    #allocation5 [shape = 'u8[8192]{0}', space=vmem, size = 0x2000, scoped, tag = 'input window, operand 1, single buffered']
    #allocation6 [shape = 's32[1]{0}', space=sflag, size = 0x4, scoped, tag = 'scoped memory for tpu_custom_call.1']
    #allocation7 [shape = 'u8[32768]{0}', space=vmem, size = 0x8000, scoped, tag = 'input window, operand 3, single buffered']
    #allocation8 [shape = 'u8[32768]{0}', space=vmem, size = 0x8000, scoped, tag = 'input window, operand 5, single buffered']
    #allocation9 [shape = 's32[1]{0}', space=sflag, size = 0x4, scoped, tag = 'scoped memory for tpu_custom_call.1']
    #allocation10 [shape = 'u8[32768]{0}', space=vmem, size = 0x8000, scoped, tag = 'input window, operand 7, single buffered']
    #allocation11 [shape = 'u8[65536]{0}', space=vmem, size = 0x10000, scoped, tag = 'input window, operand 9, single buffered']
    #allocation12 [shape = 's32[1]{0}', space=sflag, size = 0x4, scoped, tag = 'scoped memory for tpu_custom_call.1']
    #allocation13 [shape = 'u8[2048]{0}', space=vmem, size = 0x800, scoped, tag = 'output window, operand 0, single buffered']
    %17 = vsyncpa [#allocation3], 0
    %18 = vsyncpa [#allocation6], 0
    %19 = vsyncpa [#allocation9], 0
    %20 = vsyncpa [#allocation12], 0
    %21 = vsyncpa [#allocation4], 0
    // Predicated region
    $region2: #{tpu_custom_call.1} parent=1 // pred_check
      _
    $region3: #{tpu_custom_call.1} parent=1 // pred_check_branch
      %23 = sbr.rel (0) target = $region5
    $region4: #{tpu_custom_call.1} parent=1 // pred_region
      %s25 = ssub.s32 32, 32
      %26 = vsyncadd [#allocation3], %s25
      %s28 = sshll.u32 [#allocation2], 4
      %s29 = int_to_ptr.vmem [resolvable:$true] %s28
      %31 = dma.hbm_to_vmem [thread:$0]  %s0, 32, %s29, [#allocation3]
    $region5: #{tpu_custom_call.1} parent=1 // pred_fallthru
      _
    // Predicated region
    $region6: #{tpu_custom_call.1} parent=1 // pred_check
      _
    $region7: #{tpu_custom_call.1} parent=1 // pred_check_branch
      %33 = sbr.rel (0) target = $region9
    $region8: #{tpu_custom_call.1} parent=1 // pred_region
      %s35 = ssub.s32 256, 256
      %36 = vsyncadd [#allocation6], %s35
      %s37 = sshll.u32 [#allocation5], 4
      %s38 = int_to_ptr.vmem [resolvable:$true] %s37
      %43 = dma.hbm_to_vmem [thread:$0]  %s1, 256, %s38, [#allocation6], 64, 64, 4
    $region9: #{tpu_custom_call.1} parent=1 // pred_fallthru
      _
    // Predicated region
    $region10: #{tpu_custom_call.1} parent=1 // pred_check
      _
    $region11: #{tpu_custom_call.1} parent=1 // pred_check_branch
      %45 = sbr.rel (0) target = $region13
    $region12: #{tpu_custom_call.1} parent=1 // pred_region
      _
    $region13: #{tpu_custom_call.1} parent=1 // pred_fallthru
      _
    // Predicated region
    $region14: #{tpu_custom_call.1} parent=1 // pred_check
      _
    $region15: #{tpu_custom_call.1} parent=1 // pred_check_branch
      %47 = sbr.rel (0) target = $region17
    $region16: #{tpu_custom_call.1} parent=1 // pred_region
      %s49 = ssub.s32 1024, 1024
      %50 = vsyncadd [#allocation6], %s49
      %s51 = sshll.u32 [#allocation7], 4
      %s52 = int_to_ptr.vmem [resolvable:$true] %s51
      %57 = dma.hbm_to_vmem [thread:$0]  %s3, 1024, %s52, [#allocation6], 64, 64, 4
    $region17: #{tpu_custom_call.1} parent=1 // pred_fallthru
      _
    // Predicated region
    $region18: #{tpu_custom_call.1} parent=1 // pred_check
      _
    $region19: #{tpu_custom_call.1} parent=1 // pred_check_branch
      %59 = sbr.rel (0) target = $region21
    $region20: #{tpu_custom_call.1} parent=1 // pred_region
      _
    $region21: #{tpu_custom_call.1} parent=1 // pred_fallthru
      _
    // Predicated region
    $region22: #{tpu_custom_call.1} parent=1 // pred_check
      _
    $region23: #{tpu_custom_call.1} parent=1 // pred_check_branch
      %61 = sbr.rel (0) target = $region25
    $region24: #{tpu_custom_call.1} parent=1 // pred_region
      %s63 = ssub.s32 1024, 1024
      %64 = vsyncadd [#allocation9], %s63
      %s65 = sshll.u32 [#allocation8], 4
      %s66 = int_to_ptr.vmem [resolvable:$true] %s65
      %71 = dma.hbm_to_vmem [thread:$0]  %s5, 1024, %s66, [#allocation9], 64, 64, 4
    $region25: #{tpu_custom_call.1} parent=1 // pred_fallthru
      _
    // Predicated region
    $region26: #{tpu_custom_call.1} parent=1 // pred_check
      _
    $region27: #{tpu_custom_call.1} parent=1 // pred_check_branch
      %73 = sbr.rel (0) target = $region29
    $region28: #{tpu_custom_call.1} parent=1 // pred_region
      _
    $region29: #{tpu_custom_call.1} parent=1 // pred_fallthru
      _
    // Predicated region
    $region30: #{tpu_custom_call.1} parent=1 // pred_check
      _
    $region31: #{tpu_custom_call.1} parent=1 // pred_check_branch
      %75 = sbr.rel (0) target = $region33
    $region32: #{tpu_custom_call.1} parent=1 // pred_region
      %s77 = ssub.s32 1024, 1024
      %78 = vsyncadd [#allocation9], %s77
      %s79 = sshll.u32 [#allocation10], 4
      %s80 = int_to_ptr.vmem [resolvable:$true] %s79
      %85 = dma.hbm_to_vmem [thread:$0]  %s7, 1024, %s80, [#allocation9], 64, 64, 4
    $region33: #{tpu_custom_call.1} parent=1 // pred_fallthru
      _
    // Predicated region
    $region34: #{tpu_custom_call.1} parent=1 // pred_check
      _
    $region35: #{tpu_custom_call.1} parent=1 // pred_check_branch
      %87 = sbr.rel (0) target = $region37
    $region36: #{tpu_custom_call.1} parent=1 // pred_region
      _
    $region37: #{tpu_custom_call.1} parent=1 // pred_fallthru
      _
    // Predicated region
    $region38: #{tpu_custom_call.1} parent=1 // pred_check
      _
    $region39: #{tpu_custom_call.1} parent=1 // pred_check_branch
      %89 = sbr.rel (0) target = $region41
    $region40: #{tpu_custom_call.1} parent=1 // pred_region
      %s91 = ssub.s32 2048, 2048
      %92 = vsyncadd [#allocation12], %s91
      %s93 = sshll.u32 [#allocation11], 4
      %s94 = int_to_ptr.vmem [resolvable:$true] %s93
      %99 = dma.hbm_to_vmem [thread:$0]  %s9, 2048, %s94, [#allocation12], 128, 128, 8
    $region41: #{tpu_custom_call.1} parent=1 // pred_fallthru
      _
    // Predicated region
    $region42: #{tpu_custom_call.1} parent=1 // pred_check
      _
    $region43: #{tpu_custom_call.1} parent=1 // pred_check_branch
      %101 = sbr.rel (0) target = $region45
    $region44: #{tpu_custom_call.1} parent=1 // pred_region
      _
    $region45: #{tpu_custom_call.1} parent=1 // pred_fallthru
      _
    // Predicated region
    $region46: #{tpu_custom_call.1} parent=1 // pred_check
      _
    $region47: #{tpu_custom_call.1} parent=1 // pred_check_branch
      %103 = sbr.rel (0) target = $region49
    $region48: #{tpu_custom_call.1} parent=1 // pred_region
      _
    $region49: #{tpu_custom_call.1} parent=1 // pred_fallthru
      _
    // Predicated region
    $region50: #{tpu_custom_call.1} parent=1 // pred_check
      _
    $region51: #{tpu_custom_call.1} parent=1 // pred_check_branch
      %105 = sbr.rel (0) target = $region53
    $region52: #{tpu_custom_call.1} parent=1 // pred_region
      %106 = dma.done [#allocation3], 32
    $region53: #{tpu_custom_call.1} parent=1 // pred_fallthru
      _
    // Predicated region
    $region54: #{tpu_custom_call.1} parent=1 // pred_check
      _
    $region55: #{tpu_custom_call.1} parent=1 // pred_check_branch
      %108 = sbr.rel (0) target = $region57
    $region56: #{tpu_custom_call.1} parent=1 // pred_region
      %109 = dma.done [#allocation6], 256
    $region57: #{tpu_custom_call.1} parent=1 // pred_fallthru
      _
    // Predicated region
    $region58: #{tpu_custom_call.1} parent=1 // pred_check
      _
    $region59: #{tpu_custom_call.1} parent=1 // pred_check_branch
      %111 = sbr.rel (0) target = $region61
    $region60: #{tpu_custom_call.1} parent=1 // pred_region
      %112 = dma.done [#allocation6], 1024
    $region61: #{tpu_custom_call.1} parent=1 // pred_fallthru
      _
    // Predicated region
    $region62: #{tpu_custom_call.1} parent=1 // pred_check
      _
    $region63: #{tpu_custom_call.1} parent=1 // pred_check_branch
      %114 = sbr.rel (0) target = $region65
    $region64: #{tpu_custom_call.1} parent=1 // pred_region
      %115 = dma.done [#allocation9], 1024
    $region65: #{tpu_custom_call.1} parent=1 // pred_fallthru
      _
    // Predicated region
    $region66: #{tpu_custom_call.1} parent=1 // pred_check
      _
    $region67: #{tpu_custom_call.1} parent=1 // pred_check_branch
      %117 = sbr.rel (0) target = $region69
    $region68: #{tpu_custom_call.1} parent=1 // pred_region
      %118 = dma.done [#allocation9], 1024
    $region69: #{tpu_custom_call.1} parent=1 // pred_fallthru
      _
    // Predicated region
    $region70: #{tpu_custom_call.1} parent=1 // pred_check
      _
    $region71: #{tpu_custom_call.1} parent=1 // pred_check_branch
      %120 = sbr.rel (0) target = $region73
    $region72: #{tpu_custom_call.1} parent=1 // pred_region
      %121 = dma.done [#allocation12], 2048
    $region73: #{tpu_custom_call.1} parent=1 // pred_fallthru
      _
    %v123 = vld [vmem:[#allocation2] sm:$0x3]
    %v124 = vpack.c.bf16 %v123, %v123
    %v125 = vld [vmem:[#allocation5] sm:$0xf]
    %v126 = vld [vmem:[#allocation5 + $0x4] sm:$0xf]
    %v127 = vld [vmem:[#allocation5 + $0x8] sm:$0xf]
    %v128 = vld [vmem:[#allocation5 + $0xc] sm:$0xf]
    %v129 = vld [vmem:[%s2] sm:$0x1]
    %v131 = vlaneseq
    %v132 = vshrl.u32 %v131, 7
    %v133 = vsub.s32 0, %v132
    %v134 = vrot.slane %v129, %v133
    %v140 = vunpack.c.l.b16 %v125
    %v141 = vunpack.c.l.b16 %v126
    %v142 = vunpack.c.l.b16 %v127
    %v143 = vunpack.c.l.b16 %v128
    %v144 = vpack.c.b16 %v141, %v140
    %v145 = vpack.c.b16 %v143, %v142
    %vm148 = vcmask 261120
    %v150 = vsel %vm148, %v124, 0
    %152 = vmatprep.subr.bf16.mxu0 0
    %153 = vmatpush1.bf16.msra.mxu0 %v144
    %154 = vmatprep.subr.bf16.mxu0 0
    %155 = vmatpush1.bf16.msra.mxu0 %v145
    %156 = vmatprep.subr.bf16.mxu0 0
    %157 = vmatpush1.bf16.msra.mxu0 0
    %158 = vmatprep.subr.bf16.mxu0 0
    %159 = vmatpush1.bf16.msra.mxu0 0
    %160 = vmatprep.subr.bf16.mxu0 0
    %161 = vmatpush1.bf16.msra.mxu0 0
    %162 = vmatprep.subr.bf16.mxu0 0
    %163 = vmatpush1.bf16.msra.mxu0 0
    %164 = vmatprep.subr.bf16.mxu0 0
    %165 = vmatpush1.bf16.msra.mxu0 0
    %166 = vmatprep.subr.bf16.mxu0 0
    %167 = vmatpush1.bf16.msra.mxu0 0
    %168 = vmatprep.subr.bf16.mxu0 0
    %169 = vmatpush1.bf16.msra.mxu0 0
    %170 = vmatprep.subr.bf16.mxu0 0
    %171 = vmatpush1.bf16.msra.mxu0 0
    %172 = vmatprep.subr.bf16.mxu0 0
    %173 = vmatpush1.bf16.msra.mxu0 0
    %174 = vmatprep.subr.bf16.mxu0 0
    %175 = vmatpush1.bf16.msra.mxu0 0
    %176 = vmatprep.subr.bf16.mxu0 0
    %177 = vmatpush1.bf16.msra.mxu0 0
    %178 = vmatprep.subr.bf16.mxu0 0
    %179 = vmatpush1.bf16.msra.mxu0 0
    %180 = vmatprep.subr.bf16.mxu0 0
    %181 = vmatpush1.bf16.msra.mxu0 0
    %182 = vmatprep.subr.bf16.mxu0 0
    %183 = vmatpush1.bf16.msra.mxu0 0
    %184 = vmatprep.mubr.bf16.mxu0 0
    %185 = vmatmul.mubr.bf16.gmra.mrb[0].mxu0 %v150
    %v186 = vpop.f32.mrb[0].mxu0
    %v187 = vadd.f32 %v134, %v186
    %v188 = vpop.f32.mrb[0].mxu0
    %v189 = vpop.f32.mrb[0].mxu0
    %v190 = vpop.f32.mrb[0].mxu0
    %191 = vdwg.mxu0
    %v192 = vmax.f32 %v187, 0.0
    %v193 = vpack.c.bf16 %v192, %v192
    %v194 = vld [vmem:[#allocation7] sm:$0xf]
    %v195 = vld [vmem:[#allocation7 + $0x4] sm:$0xf]
    %v196 = vld [vmem:[#allocation7 + $0x8] sm:$0xf]
    %v197 = vld [vmem:[#allocation7 + $0xc] sm:$0xf]
    %v198 = vld [vmem:[#allocation7 + $0x10] sm:$0xf]
    %v199 = vld [vmem:[#allocation7 + $0x14] sm:$0xf]
    %v200 = vld [vmem:[#allocation7 + $0x18] sm:$0xf]
    %v201 = vld [vmem:[#allocation7 + $0x1c] sm:$0xf]
    %v202 = vld [vmem:[#allocation7 + $0x20] sm:$0xf]
    %v203 = vld [vmem:[#allocation7 + $0x24] sm:$0xf]
    %v204 = vld [vmem:[#allocation7 + $0x28] sm:$0xf]
    %v205 = vld [vmem:[#allocation7 + $0x2c] sm:$0xf]
    %v206 = vld [vmem:[#allocation7 + $0x30] sm:$0xf]
    %v207 = vld [vmem:[#allocation7 + $0x34] sm:$0xf]
    %v208 = vld [vmem:[#allocation7 + $0x38] sm:$0xf]
    %v209 = vld [vmem:[#allocation7 + $0x3c] sm:$0xf]
    %v210 = vld [vmem:[%s4] sm:$0x1]
    %v212 = vlaneseq
    %v213 = vshrl.u32 %v212, 7
    %v214 = vsub.s32 0, %v213
    %v215 = vrot.slane %v210, %v214
    %v233 = vunpack.c.l.b16 %v194
    %v234 = vunpack.c.l.b16 %v195
    %v235 = vunpack.c.l.b16 %v196
    %v236 = vunpack.c.l.b16 %v197
    %v237 = vunpack.c.l.b16 %v198
    %v238 = vunpack.c.l.b16 %v199
    %v239 = vunpack.c.l.b16 %v200
    %v240 = vunpack.c.l.b16 %v201
    %v241 = vunpack.c.l.b16 %v202
    %v242 = vunpack.c.l.b16 %v203
    %v243 = vunpack.c.l.b16 %v204
    %v244 = vunpack.c.l.b16 %v205
    %v245 = vunpack.c.l.b16 %v206
    %v246 = vunpack.c.l.b16 %v207
    %v247 = vunpack.c.l.b16 %v208
    %v248 = vunpack.c.l.b16 %v209
    %v249 = vpack.c.b16 %v234, %v233
    %v250 = vpack.c.b16 %v236, %v235
    %v251 = vpack.c.b16 %v238, %v237
    %v252 = vpack.c.b16 %v240, %v239
    %v253 = vpack.c.b16 %v242, %v241
    %v254 = vpack.c.b16 %v244, %v243
    %v255 = vpack.c.b16 %v246, %v245
    %v256 = vpack.c.b16 %v248, %v247
    %265 = vmatprep.subr.bf16.mxu0 0
    %266 = vmatpush1.bf16.msra.mxu0 %v249
    %267 = vmatprep.subr.bf16.mxu0 0
    %268 = vmatpush1.bf16.msra.mxu0 %v250
    %269 = vmatprep.subr.bf16.mxu0 0
    %270 = vmatpush1.bf16.msra.mxu0 %v251
    %271 = vmatprep.subr.bf16.mxu0 0
    %272 = vmatpush1.bf16.msra.mxu0 %v252
    %273 = vmatprep.subr.bf16.mxu0 0
    %274 = vmatpush1.bf16.msra.mxu0 %v253
    %275 = vmatprep.subr.bf16.mxu0 0
    %276 = vmatpush1.bf16.msra.mxu0 %v254
    %277 = vmatprep.subr.bf16.mxu0 0
    %278 = vmatpush1.bf16.msra.mxu0 %v255
    %279 = vmatprep.subr.bf16.mxu0 0
    %280 = vmatpush1.bf16.msra.mxu0 %v256
    %281 = vmatprep.subr.bf16.mxu0 0
    %282 = vmatpush1.bf16.msra.mxu0 0
    %283 = vmatprep.subr.bf16.mxu0 0
    %284 = vmatpush1.bf16.msra.mxu0 0
    %285 = vmatprep.subr.bf16.mxu0 0
    %286 = vmatpush1.bf16.msra.mxu0 0
    %287 = vmatprep.subr.bf16.mxu0 0
    %288 = vmatpush1.bf16.msra.mxu0 0
    %289 = vmatprep.subr.bf16.mxu0 0
    %290 = vmatpush1.bf16.msra.mxu0 0
    %291 = vmatprep.subr.bf16.mxu0 0
    %292 = vmatpush1.bf16.msra.mxu0 0
    %293 = vmatprep.subr.bf16.mxu0 0
    %294 = vmatpush1.bf16.msra.mxu0 0
    %295 = vmatprep.subr.bf16.mxu0 0
    %296 = vmatpush1.bf16.msra.mxu0 0
    %297 = vmatprep.mubr.bf16.mxu0 0
    %298 = vmatmul.mubr.bf16.gmra.mrb[0].mxu0 %v193
    %v299 = vpop.f32.mrb[0].mxu0
    %v300 = vadd.f32 %v215, %v299
    %v301 = vpop.f32.mrb[0].mxu0
    %v302 = vpop.f32.mrb[0].mxu0
    %v303 = vpop.f32.mrb[0].mxu0
    %304 = vdwg.mxu0
    %v305 = vmax.f32 %v300, 0.0
    %v306 = vpack.c.bf16 %v305, %v305
    %v307 = vld [vmem:[#allocation8] sm:$0xf]
    %v308 = vld [vmem:[#allocation8 + $0x4] sm:$0xf]
    %v309 = vld [vmem:[#allocation8 + $0x8] sm:$0xf]
    %v310 = vld [vmem:[#allocation8 + $0xc] sm:$0xf]
    %v311 = vld [vmem:[#allocation8 + $0x10] sm:$0xf]
    %v312 = vld [vmem:[#allocation8 + $0x14] sm:$0xf]
    %v313 = vld [vmem:[#allocation8 + $0x18] sm:$0xf]
    %v314 = vld [vmem:[#allocation8 + $0x1c] sm:$0xf]
    %v315 = vld [vmem:[#allocation8 + $0x20] sm:$0xf]
    %v316 = vld [vmem:[#allocation8 + $0x24] sm:$0xf]
    %v317 = vld [vmem:[#allocation8 + $0x28] sm:$0xf]
    %v318 = vld [vmem:[#allocation8 + $0x2c] sm:$0xf]
    %v319 = vld [vmem:[#allocation8 + $0x30] sm:$0xf]
    %v320 = vld [vmem:[#allocation8 + $0x34] sm:$0xf]
    %v321 = vld [vmem:[#allocation8 + $0x38] sm:$0xf]
    %v322 = vld [vmem:[#allocation8 + $0x3c] sm:$0xf]
    %v323 = vld [vmem:[%s6] sm:$0x1]
    %v325 = vlaneseq
    %v326 = vshrl.u32 %v325, 7
    %v327 = vsub.s32 0, %v326
    %v328 = vrot.slane %v323, %v327
    %v346 = vunpack.c.l.b16 %v307
    %v347 = vunpack.c.l.b16 %v308
    %v348 = vunpack.c.l.b16 %v309
    %v349 = vunpack.c.l.b16 %v310
    %v350 = vunpack.c.l.b16 %v311
    %v351 = vunpack.c.l.b16 %v312
    %v352 = vunpack.c.l.b16 %v313
    %v353 = vunpack.c.l.b16 %v314
    %v354 = vunpack.c.l.b16 %v315
    %v355 = vunpack.c.l.b16 %v316
    %v356 = vunpack.c.l.b16 %v317
    %v357 = vunpack.c.l.b16 %v318
    %v358 = vunpack.c.l.b16 %v319
    %v359 = vunpack.c.l.b16 %v320
    %v360 = vunpack.c.l.b16 %v321
    %v361 = vunpack.c.l.b16 %v322
    %v362 = vpack.c.b16 %v347, %v346
    %v363 = vpack.c.b16 %v349, %v348
    %v364 = vpack.c.b16 %v351, %v350
    %v365 = vpack.c.b16 %v353, %v352
    %v366 = vpack.c.b16 %v355, %v354
    %v367 = vpack.c.b16 %v357, %v356
    %v368 = vpack.c.b16 %v359, %v358
    %v369 = vpack.c.b16 %v361, %v360
    %378 = vmatprep.subr.bf16.mxu0 0
    %379 = vmatpush1.bf16.msra.mxu0 %v362
    %380 = vmatprep.subr.bf16.mxu0 0
    %381 = vmatpush1.bf16.msra.mxu0 %v363
    %382 = vmatprep.subr.bf16.mxu0 0
    %383 = vmatpush1.bf16.msra.mxu0 %v364
    %384 = vmatprep.subr.bf16.mxu0 0
    %385 = vmatpush1.bf16.msra.mxu0 %v365
    %386 = vmatprep.subr.bf16.mxu0 0
    %387 = vmatpush1.bf16.msra.mxu0 %v366
    %388 = vmatprep.subr.bf16.mxu0 0
    %389 = vmatpush1.bf16.msra.mxu0 %v367
    %390 = vmatprep.subr.bf16.mxu0 0
    %391 = vmatpush1.bf16.msra.mxu0 %v368
    %392 = vmatprep.subr.bf16.mxu0 0
    %393 = vmatpush1.bf16.msra.mxu0 %v369
    %394 = vmatprep.subr.bf16.mxu0 0
    %395 = vmatpush1.bf16.msra.mxu0 0
    %396 = vmatprep.subr.bf16.mxu0 0
    %397 = vmatpush1.bf16.msra.mxu0 0
    %398 = vmatprep.subr.bf16.mxu0 0
    %399 = vmatpush1.bf16.msra.mxu0 0
    %400 = vmatprep.subr.bf16.mxu0 0
    %401 = vmatpush1.bf16.msra.mxu0 0
    %402 = vmatprep.subr.bf16.mxu0 0
    %403 = vmatpush1.bf16.msra.mxu0 0
    %404 = vmatprep.subr.bf16.mxu0 0
    %405 = vmatpush1.bf16.msra.mxu0 0
    %406 = vmatprep.subr.bf16.mxu0 0
    %407 = vmatpush1.bf16.msra.mxu0 0
    %408 = vmatprep.subr.bf16.mxu0 0
    %409 = vmatpush1.bf16.msra.mxu0 0
    %410 = vmatprep.mubr.bf16.mxu0 0
    %411 = vmatmul.mubr.bf16.gmra.mrb[0].mxu0 %v306
    %v412 = vpop.f32.mrb[0].mxu0
    %v413 = vadd.f32 %v328, %v412
    %v414 = vpop.f32.mrb[0].mxu0
    %v415 = vpop.f32.mrb[0].mxu0
    %v416 = vpop.f32.mrb[0].mxu0
    %417 = vdwg.mxu0
    %v418 = vmax.f32 %v413, 0.0
    %v419 = vpack.c.bf16 %v418, %v418
    %v420 = vld [vmem:[#allocation10] sm:$0xf]
    %v421 = vld [vmem:[#allocation10 + $0x4] sm:$0xf]
    %v422 = vld [vmem:[#allocation10 + $0x8] sm:$0xf]
    %v423 = vld [vmem:[#allocation10 + $0xc] sm:$0xf]
    %v424 = vld [vmem:[#allocation10 + $0x10] sm:$0xf]
    %v425 = vld [vmem:[#allocation10 + $0x14] sm:$0xf]
    %v426 = vld [vmem:[#allocation10 + $0x18] sm:$0xf]
    %v427 = vld [vmem:[#allocation10 + $0x1c] sm:$0xf]
    %v428 = vld [vmem:[#allocation10 + $0x20] sm:$0xf]
    %v429 = vld [vmem:[#allocation10 + $0x24] sm:$0xf]
    %v430 = vld [vmem:[#allocation10 + $0x28] sm:$0xf]
    %v431 = vld [vmem:[#allocation10 + $0x2c] sm:$0xf]
    %v432 = vld [vmem:[#allocation10 + $0x30] sm:$0xf]
    %v433 = vld [vmem:[#allocation10 + $0x34] sm:$0xf]
    %v434 = vld [vmem:[#allocation10 + $0x38] sm:$0xf]
    %v435 = vld [vmem:[#allocation10 + $0x3c] sm:$0xf]
    %v436 = vld [vmem:[%s8] sm:$0x1]
    %v438 = vlaneseq
    %v439 = vshrl.u32 %v438, 7
    %v440 = vsub.s32 0, %v439
    %v441 = vrot.slane %v436, %v440
    %v459 = vunpack.c.l.b16 %v420
    %v460 = vunpack.c.l.b16 %v421
    %v461 = vunpack.c.l.b16 %v422
    %v462 = vunpack.c.l.b16 %v423
    %v463 = vunpack.c.l.b16 %v424
    %v464 = vunpack.c.l.b16 %v425
    %v465 = vunpack.c.l.b16 %v426
    %v466 = vunpack.c.l.b16 %v427
    %v467 = vunpack.c.l.b16 %v428
    %v468 = vunpack.c.l.b16 %v429
    %v469 = vunpack.c.l.b16 %v430
    %v470 = vunpack.c.l.b16 %v431
    %v471 = vunpack.c.l.b16 %v432
    %v472 = vunpack.c.l.b16 %v433
    %v473 = vunpack.c.l.b16 %v434
    %v474 = vunpack.c.l.b16 %v435
    %v475 = vpack.c.b16 %v460, %v459
    %v476 = vpack.c.b16 %v462, %v461
    %v477 = vpack.c.b16 %v464, %v463
    %v478 = vpack.c.b16 %v466, %v465
    %v479 = vpack.c.b16 %v468, %v467
    %v480 = vpack.c.b16 %v470, %v469
    %v481 = vpack.c.b16 %v472, %v471
    %v482 = vpack.c.b16 %v474, %v473
    %491 = vmatprep.subr.bf16.mxu0 0
    %492 = vmatpush1.bf16.msra.mxu0 %v475
    %493 = vmatprep.subr.bf16.mxu0 0
    %494 = vmatpush1.bf16.msra.mxu0 %v476
    %495 = vmatprep.subr.bf16.mxu0 0
    %496 = vmatpush1.bf16.msra.mxu0 %v477
    %497 = vmatprep.subr.bf16.mxu0 0
    %498 = vmatpush1.bf16.msra.mxu0 %v478
    %499 = vmatprep.subr.bf16.mxu0 0
    %500 = vmatpush1.bf16.msra.mxu0 %v479
    %501 = vmatprep.subr.bf16.mxu0 0
    %502 = vmatpush1.bf16.msra.mxu0 %v480
    %503 = vmatprep.subr.bf16.mxu0 0
    %504 = vmatpush1.bf16.msra.mxu0 %v481
    %505 = vmatprep.subr.bf16.mxu0 0
    %506 = vmatpush1.bf16.msra.mxu0 %v482
    %507 = vmatprep.subr.bf16.mxu0 0
    %508 = vmatpush1.bf16.msra.mxu0 0
    %509 = vmatprep.subr.bf16.mxu0 0
    %510 = vmatpush1.bf16.msra.mxu0 0
    %511 = vmatprep.subr.bf16.mxu0 0
    %512 = vmatpush1.bf16.msra.mxu0 0
    %513 = vmatprep.subr.bf16.mxu0 0
    %514 = vmatpush1.bf16.msra.mxu0 0
    %515 = vmatprep.subr.bf16.mxu0 0
    %516 = vmatpush1.bf16.msra.mxu0 0
    %517 = vmatprep.subr.bf16.mxu0 0
    %518 = vmatpush1.bf16.msra.mxu0 0
    %519 = vmatprep.subr.bf16.mxu0 0
    %520 = vmatpush1.bf16.msra.mxu0 0
    %521 = vmatprep.subr.bf16.mxu0 0
    %522 = vmatpush1.bf16.msra.mxu0 0
    %523 = vmatprep.mubr.bf16.mxu0 0
    %524 = vmatmul.mubr.bf16.gmra.mrb[0].mxu0 %v419
    %v525 = vpop.f32.mrb[0].mxu0
    %v526 = vadd.f32 %v441, %v525
    %v527 = vpop.f32.mrb[0].mxu0
    %v528 = vpop.f32.mrb[0].mxu0
    %v529 = vpop.f32.mrb[0].mxu0
    %530 = vdwg.mxu0
    %v531 = vmax.f32 %v526, 0.0
    %v532 = vpack.c.bf16 %v531, %v531
    %v533 = vld [vmem:[#allocation11] sm:$0xff]
    %v534 = vld [vmem:[#allocation11 + $0x8] sm:$0xff]
    %v535 = vld [vmem:[#allocation11 + $0x10] sm:$0xff]
    %v536 = vld [vmem:[#allocation11 + $0x18] sm:$0xff]
    %v537 = vld [vmem:[#allocation11 + $0x20] sm:$0xff]
    %v538 = vld [vmem:[#allocation11 + $0x28] sm:$0xff]
    %v539 = vld [vmem:[#allocation11 + $0x30] sm:$0xff]
    %v540 = vld [vmem:[#allocation11 + $0x38] sm:$0xff]
    %v541 = vld [vmem:[#allocation11 + $0x40] sm:$0xff]
    %v542 = vld [vmem:[#allocation11 + $0x48] sm:$0xff]
    %v543 = vld [vmem:[#allocation11 + $0x50] sm:$0xff]
    %v544 = vld [vmem:[#allocation11 + $0x58] sm:$0xff]
    %v545 = vld [vmem:[#allocation11 + $0x60] sm:$0xff]
    %v546 = vld [vmem:[#allocation11 + $0x68] sm:$0xff]
    %v547 = vld [vmem:[#allocation11 + $0x70] sm:$0xff]
    %v548 = vld [vmem:[#allocation11 + $0x78] sm:$0xff]
    %v549 = vld [vmem:[%s10] sm:$0x3]
    %v551 = vlaneseq
    %v552 = vshrl.u32 %v551, 7
    %v553 = vsub.s32 0, %v552
    %v554 = vrot.slane %v549, %v553
    %v555 = vlaneseq
    %v556 = vshrl.u32 %v555, 7
    %v557 = vsub.s32 1, %v556
    %v558 = vrot.slane %v549, %v557
    %v577 = vunpack.c.l.b16 %v533
    %v578 = vunpack.c.h.b16 %v533
    %v579 = vunpack.c.l.b16 %v534
    %v580 = vunpack.c.h.b16 %v534
    %v581 = vunpack.c.l.b16 %v535
    %v582 = vunpack.c.h.b16 %v535
    %v583 = vunpack.c.l.b16 %v536
    %v584 = vunpack.c.h.b16 %v536
    %v585 = vunpack.c.l.b16 %v537
    %v586 = vunpack.c.h.b16 %v537
    %v587 = vunpack.c.l.b16 %v538
    %v588 = vunpack.c.h.b16 %v538
    %v589 = vunpack.c.l.b16 %v539
    %v590 = vunpack.c.h.b16 %v539
    %v591 = vunpack.c.l.b16 %v540
    %v592 = vunpack.c.h.b16 %v540
    %v593 = vunpack.c.l.b16 %v541
    %v594 = vunpack.c.h.b16 %v541
    %v595 = vunpack.c.l.b16 %v542
    %v596 = vunpack.c.h.b16 %v542
    %v597 = vunpack.c.l.b16 %v543
    %v598 = vunpack.c.h.b16 %v543
    %v599 = vunpack.c.l.b16 %v544
    %v600 = vunpack.c.h.b16 %v544
    %v601 = vunpack.c.l.b16 %v545
    %v602 = vunpack.c.h.b16 %v545
    %v603 = vunpack.c.l.b16 %v546
    %v604 = vunpack.c.h.b16 %v546
    %v605 = vunpack.c.l.b16 %v547
    %v606 = vunpack.c.h.b16 %v547
    %v607 = vunpack.c.l.b16 %v548
    %v608 = vunpack.c.h.b16 %v548
    %v609 = vpack.c.b16 %v579, %v577
    %v610 = vpack.c.b16 %v580, %v578
    %v611 = vpack.c.b16 %v583, %v581
    %v612 = vpack.c.b16 %v584, %v582
    %v613 = vpack.c.b16 %v587, %v585
    %v614 = vpack.c.b16 %v588, %v586
    %v615 = vpack.c.b16 %v591, %v589
    %v616 = vpack.c.b16 %v592, %v590
    %v617 = vpack.c.b16 %v595, %v593
    %v618 = vpack.c.b16 %v596, %v594
    %v619 = vpack.c.b16 %v599, %v597
    %v620 = vpack.c.b16 %v600, %v598
    %v621 = vpack.c.b16 %v603, %v601
    %v622 = vpack.c.b16 %v604, %v602
    %v623 = vpack.c.b16 %v607, %v605
    %v624 = vpack.c.b16 %v608, %v606
    %641 = vmatprep.subr.bf16.mxu0 %v610
    %642 = vmatpush1.bf16.msra.mxu0 %v609
    %643 = vmatprep.subr.bf16.mxu0 %v612
    %644 = vmatpush1.bf16.msra.mxu0 %v611
    %645 = vmatprep.subr.bf16.mxu0 %v614
    %646 = vmatpush1.bf16.msra.mxu0 %v613
    %647 = vmatprep.subr.bf16.mxu0 %v616
    %648 = vmatpush1.bf16.msra.mxu0 %v615
    %649 = vmatprep.subr.bf16.mxu0 %v618
    %650 = vmatpush1.bf16.msra.mxu0 %v617
    %651 = vmatprep.subr.bf16.mxu0 %v620
    %652 = vmatpush1.bf16.msra.mxu0 %v619
    %653 = vmatprep.subr.bf16.mxu0 %v622
    %654 = vmatpush1.bf16.msra.mxu0 %v621
    %655 = vmatprep.subr.bf16.mxu0 %v624
    %656 = vmatpush1.bf16.msra.mxu0 %v623
    %657 = vmatprep.subr.bf16.mxu0 0
    %658 = vmatpush1.bf16.msra.mxu0 0
    %659 = vmatprep.subr.bf16.mxu0 0
    %660 = vmatpush1.bf16.msra.mxu0 0
    %661 = vmatprep.subr.bf16.mxu0 0
    %662 = vmatpush1.bf16.msra.mxu0 0
    %663 = vmatprep.subr.bf16.mxu0 0
    %664 = vmatpush1.bf16.msra.mxu0 0
    %665 = vmatprep.subr.bf16.mxu0 0
    %666 = vmatpush1.bf16.msra.mxu0 0
    %667 = vmatprep.subr.bf16.mxu0 0
    %668 = vmatpush1.bf16.msra.mxu0 0
    %669 = vmatprep.subr.bf16.mxu0 0
    %670 = vmatpush1.bf16.msra.mxu0 0
    %671 = vmatprep.subr.bf16.mxu0 0
    %672 = vmatpush1.bf16.msra.mxu0 0
    %673 = vmatprep.mubr.bf16.mxu0 0
    %674 = vmatmul.mubr.bf16.gmra.mrb[0].mxu0 %v532
    %v675 = vpop.f32.mrb[0].mxu0
    %v676 = vadd.f32 %v554, %v675
    %v677 = vpop.f32.mrb[0].mxu0
    %v678 = vadd.f32 %v558, %v677
    %v679 = vpop.f32.mrb[0].mxu0
    %v680 = vpop.f32.mrb[0].mxu0
    %681 = vdwg.mxu0
    %v682 = vld [vmem:[%s11] sm:$0xff]
    %v683 = vld [vmem:[%s11 + $0x8] sm:$0xff]
    %v684 = vunpack.c.l.bf16 %v682
    %v685 = vunpack.c.h.bf16 %v682
    %v686 = vunpack.c.l.bf16 %v683
    %v687 = vunpack.c.h.bf16 %v683
    %689 = vrot.lane.b32.xlu0 %v676, 112
    %v690 = vpop.permute.xlu0 %689
    %692 = vrot.lane.b32.xlu0 %v676, 96
    %v693 = vpop.permute.xlu0 %692
    %695 = vrot.lane.b32.xlu0 %v676, 80
    %v696 = vpop.permute.xlu0 %695
    %698 = vrot.lane.b32.xlu0 %v676, 64
    %v699 = vpop.permute.xlu0 %698
    %701 = vrot.lane.b32.xlu0 %v676, 48
    %v702 = vpop.permute.xlu0 %701
    %704 = vrot.lane.b32.xlu0 %v676, 32
    %v705 = vpop.permute.xlu0 %704
    %707 = vrot.lane.b32.xlu0 %v676, 16
    %v708 = vpop.permute.xlu0 %707
    %711 = vrot.lane.b32.xlu0 %v678, 112
    %v712 = vpop.permute.xlu0 %711
    %714 = vrot.lane.b32.xlu0 %v678, 96
    %v715 = vpop.permute.xlu0 %714
    %717 = vrot.lane.b32.xlu0 %v678, 80
    %v718 = vpop.permute.xlu0 %717
    %720 = vrot.lane.b32.xlu0 %v678, 64
    %v721 = vpop.permute.xlu0 %720
    %723 = vrot.lane.b32.xlu0 %v678, 48
    %v724 = vpop.permute.xlu0 %723
    %726 = vrot.lane.b32.xlu0 %v678, 32
    %v727 = vpop.permute.xlu0 %726
    %729 = vrot.lane.b32.xlu0 %v678, 16
    %v730 = vpop.permute.xlu0 %729
    %v732 = vcombine.low %v676, %v693
    %v734 = vunpack.c.l.s4 1983009808
    %v735 = vunpack.c.0.s8 %v734
    %v736 = vlaneseq
    %v737 = vshrl.u32 %v736, 7
    %v738 = vsub.s32 %v735, %v737
    %v739 = vrot.slane %v732, %v738
    %v740 = vcombine.low %v690, %v696
    %v742 = vunpack.c.l.s4 1983009808
    %v743 = vunpack.c.0.s8 %v742
    %v744 = vlaneseq
    %v745 = vshrl.u32 %v744, 7
    %v746 = vsub.s32 %v743, %v745
    %v747 = vrot.slane %v740, %v746
    %v748 = vcombine.low %v699, %v705
    %v750 = vunpack.c.l.s4 1983009808
    %v751 = vunpack.c.0.s8 %v750
    %v752 = vlaneseq
    %v753 = vshrl.u32 %v752, 7
    %v754 = vsub.s32 %v751, %v753
    %v755 = vrot.slane %v748, %v754
    %v756 = vcombine.low %v702, %v708
    %v758 = vunpack.c.l.s4 1983009808
    %v759 = vunpack.c.0.s8 %v758
    %v760 = vlaneseq
    %v761 = vshrl.u32 %v760, 7
    %v762 = vsub.s32 %v759, %v761
    %v763 = vrot.slane %v756, %v762
    %v764 = vcombine.low %v739, %v747
    %v766 = vunpack.c.l.s4 1934713408
    %v767 = vunpack.c.0.s8 %v766
    %v768 = vlaneseq
    %v769 = vshrl.u32 %v768, 7
    %v770 = vsub.s32 %v767, %v769
    %v771 = vrot.slane %v764, %v770
    %v772 = vcombine.low %v755, %v763
    %v774 = vunpack.c.l.s4 1934713408
    %v775 = vunpack.c.0.s8 %v774
    %v776 = vlaneseq
    %v777 = vshrl.u32 %v776, 7
    %v778 = vsub.s32 %v775, %v777
    %v779 = vrot.slane %v772, %v778
    %v780 = vcombine.low %v771, %v779
    %v781 = vcombine.high %v771, %v779
    %v782 = vcombine.low %v678, %v715
    %v784 = vunpack.c.l.s4 1983009808
    %v785 = vunpack.c.0.s8 %v784
    %v786 = vlaneseq
    %v787 = vshrl.u32 %v786, 7
    %v788 = vsub.s32 %v785, %v787
    %v789 = vrot.slane %v782, %v788
    %v790 = vcombine.low %v712, %v718
    %v792 = vunpack.c.l.s4 1983009808
    %v793 = vunpack.c.0.s8 %v792
    %v794 = vlaneseq
    %v795 = vshrl.u32 %v794, 7
    %v796 = vsub.s32 %v793, %v795
    %v797 = vrot.slane %v790, %v796
    %v798 = vcombine.low %v721, %v727
    %v800 = vunpack.c.l.s4 1983009808
    %v801 = vunpack.c.0.s8 %v800
    %v802 = vlaneseq
    %v803 = vshrl.u32 %v802, 7
    %v804 = vsub.s32 %v801, %v803
    %v805 = vrot.slane %v798, %v804
    %v806 = vcombine.low %v724, %v730
    %v808 = vunpack.c.l.s4 1983009808
    %v809 = vunpack.c.0.s8 %v808
    %v810 = vlaneseq
    %v811 = vshrl.u32 %v810, 7
    %v812 = vsub.s32 %v809, %v811
    %v813 = vrot.slane %v806, %v812
    %v814 = vcombine.low %v789, %v797
    %v816 = vunpack.c.l.s4 1934713408
    %v817 = vunpack.c.0.s8 %v816
    %v818 = vlaneseq
    %v819 = vshrl.u32 %v818, 7
    %v820 = vsub.s32 %v817, %v819
    %v821 = vrot.slane %v814, %v820
    %v822 = vcombine.low %v805, %v813
    %v824 = vunpack.c.l.s4 1934713408
    %v825 = vunpack.c.0.s8 %v824
    %v826 = vlaneseq
    %v827 = vshrl.u32 %v826, 7
    %v828 = vsub.s32 %v825, %v827
    %v829 = vrot.slane %v822, %v828
    %v830 = vcombine.low %v821, %v829
    %v831 = vcombine.high %v821, %v829
    %vm832 = vcmask 130048
    %v833 = vsel %vm832, %v780, -inf
    %834 = vmax.xlane.f32.xlu0 %v833
    %v835 = vpop.xlane.xlu0 %834
    %v836 = vsel %vm832, %v830, -inf
    %837 = vmax.xlane.f32.xlu0 %v836
    %v838 = vpop.xlane.xlu0 %837
    %v839 = vsel %vm832, %v781, -inf
    %840 = vmax.xlane.f32.xlu0 %v839
    %v841 = vpop.xlane.xlu0 %840
    %v842 = vsel %vm832, %v831, -inf
    %843 = vmax.xlane.f32.xlu0 %v842
    %v844 = vpop.xlane.xlu0 %843
    %v849 = vlaneseq
    %v850 = vand.u32 %v849, 127
    %v851 = vlaneseq
    %v852 = vshrl.u32 %v851, 7
    %v853 = vsub.s32 %v850, %v852
    %v854 = vrot.slane %v835, %v853
    %v855 = vadd.s32 %v850, 4294967288
    %v856 = vlaneseq
    %v857 = vshrl.u32 %v856, 7
    %v858 = vsub.s32 %v855, %v857
    %v859 = vrot.slane %v838, %v858
    %vm860 = vcmask 130112
    %v861 = vsel %vm860, %v859, %v854
    %v862 = vlaneseq
    %v863 = vshrl.u32 %v862, 7
    %v864 = vsub.s32 %v850, %v863
    %v865 = vrot.slane %v841, %v864
    %v866 = vlaneseq
    %v867 = vshrl.u32 %v866, 7
    %v868 = vsub.s32 %v855, %v867
    %v869 = vrot.slane %v844, %v868
    %v870 = vsel %vm860, %v869, %v865
    %vm871 = vcmask 1041409
    %v872 = vsel %vm871, %v870, %v861
    %v873 = vsel %vm832, %v872, 0
    %875 = vmatprep.subr.mxu0 %v685
    %876 = vmatpush1.msra.mxu0 %v684
    %877 = vmatprep.subr.mxu0 %v687
    %878 = vmatpush1.msra.mxu0 %v686
    %879 = vmatprep.subr.mxu0 0.0
    %880 = vmatpush1.msra.mxu0 0.0
    %881 = vmatprep.subr.mxu0 0.0
    %882 = vmatpush1.msra.mxu0 0.0
    %883 = vmatprep.subr.mxu0 0.0
    %884 = vmatpush1.msra.mxu0 0.0
    %885 = vmatprep.subr.mxu0 0.0
    %886 = vmatpush1.msra.mxu0 0.0
    %887 = vmatprep.subr.mxu0 0.0
    %888 = vmatpush1.msra.mxu0 0.0
    %889 = vmatprep.subr.mxu0 0.0
    %890 = vmatpush1.msra.mxu0 0.0
    %891 = vmatprep.subr.mxu0 0.0
    %892 = vmatpush1.msra.mxu0 0.0
    %893 = vmatprep.subr.mxu0 0.0
    %894 = vmatpush1.msra.mxu0 0.0
    %895 = vmatprep.subr.mxu0 0.0
    %896 = vmatpush1.msra.mxu0 0.0
    %897 = vmatprep.subr.mxu0 0.0
    %898 = vmatpush1.msra.mxu0 0.0
    %899 = vmatprep.subr.mxu0 0.0
    %900 = vmatpush1.msra.mxu0 0.0
    %901 = vmatprep.subr.mxu0 0.0
    %902 = vmatpush1.msra.mxu0 0.0
    %903 = vmatprep.subr.mxu0 0.0
    %904 = vmatpush1.msra.mxu0 0.0
    %905 = vmatprep.subr.mxu0 0.0
    %906 = vmatpush1.msra.mxu0 0.0
    %907 = vmatprep.subr.mxu0 0.0
    %908 = vmatpush1.msra.mxu0 0.0
    %909 = vmatprep.subr.mxu0 0.0
    %910 = vmatpush1.msra.mxu0 0.0
    %911 = vmatprep.subr.mxu0 0.0
    %912 = vmatpush1.msra.mxu0 0.0
    %913 = vmatprep.subr.mxu0 0.0
    %914 = vmatpush1.msra.mxu0 0.0
    %915 = vmatprep.subr.mxu0 0.0
    %916 = vmatpush1.msra.mxu0 0.0
    %917 = vmatprep.subr.mxu0 0.0
    %918 = vmatpush1.msra.mxu0 0.0
    %919 = vmatprep.subr.mxu0 0.0
    %920 = vmatpush1.msra.mxu0 0.0
    %921 = vmatprep.subr.mxu0 0.0
    %922 = vmatpush1.msra.mxu0 0.0
    %923 = vmatprep.subr.mxu0 0.0
    %924 = vmatpush1.msra.mxu0 0.0
    %925 = vmatprep.subr.mxu0 0.0
    %926 = vmatpush1.msra.mxu0 0.0
    %927 = vmatprep.subr.mxu0 0.0
    %928 = vmatpush1.msra.mxu0 0.0
    %929 = vmatprep.subr.mxu0 0.0
    %930 = vmatpush1.msra.mxu0 0.0
    %931 = vmatprep.subr.mxu0 0.0
    %932 = vmatpush1.msra.mxu0 0.0
    %933 = vmatprep.subr.mxu0 0.0
    %934 = vmatpush1.msra.mxu0 0.0
    %935 = vmatprep.subr.mxu0 0.0
    %936 = vmatpush1.msra.mxu0 0.0
    %937 = vmatprep.subr.mxu0 0.0
    %938 = vmatpush1.msra.mxu0 0.0
    %939 = vmatprep.mubr.f32.mxu0 0.0
    %940 = vmatmul.mubr.f32.gmra.mrb[0].mxu0 %v873
    %v941 = vpop.f32.mrb[0].mxu0
    %v942 = vadd.f32 0.0, %v941
    %v943 = vpop.f32.mrb[0].mxu0
    %v944 = vadd.f32 0.0, %v943
    %945 = vdwg.mxu0
    %v946 = vsub.f32 %v676, %v942
    %v947 = vsub.f32 %v678, %v944
    %v948 = vmul.f32 %v946, 1.442695
    %v949 = vpow.pop %v948
    %v950 = vmul.f32 %v947, 1.442695
    %v951 = vpow.pop %v950
    %952 = vmatprep.subr.mxu0 %v685
    %953 = vmatpush1.xpose.msra.mxu0 %v684
    %954 = vmatprep.subr.mxu0 %v687
    %955 = vmatpush1.xpose.msra.mxu0 %v686
    %956 = vmatprep.subr.mxu0 0.0
    %957 = vmatpush1.xpose.msra.mxu0 0.0
    %958 = vmatprep.subr.mxu0 0.0
    %959 = vmatpush1.xpose.msra.mxu0 0.0
    %960 = vmatprep.subr.mxu0 0.0
    %961 = vmatpush1.xpose.msra.mxu0 0.0
    %962 = vmatprep.subr.mxu0 0.0
    %963 = vmatpush1.xpose.msra.mxu0 0.0
    %964 = vmatprep.subr.mxu0 0.0
    %965 = vmatpush1.xpose.msra.mxu0 0.0
    %966 = vmatprep.subr.mxu0 0.0
    %967 = vmatpush1.xpose.msra.mxu0 0.0
    %968 = vmatprep.subr.mxu0 0.0
    %969 = vmatpush1.xpose.msra.mxu0 0.0
    %970 = vmatprep.subr.mxu0 0.0
    %971 = vmatpush1.xpose.msra.mxu0 0.0
    %972 = vmatprep.subr.mxu0 0.0
    %973 = vmatpush1.xpose.msra.mxu0 0.0
    %974 = vmatprep.subr.mxu0 0.0
    %975 = vmatpush1.xpose.msra.mxu0 0.0
    %976 = vmatprep.subr.mxu0 0.0
    %977 = vmatpush1.xpose.msra.mxu0 0.0
    %978 = vmatprep.subr.mxu0 0.0
    %979 = vmatpush1.xpose.msra.mxu0 0.0
    %980 = vmatprep.subr.mxu0 0.0
    %981 = vmatpush1.xpose.msra.mxu0 0.0
    %982 = vmatprep.subr.mxu0 0.0
    %983 = vmatpush1.xpose.msra.mxu0 0.0
    %984 = vmatprep.subr.mxu0 0.0
    %985 = vmatpush1.xpose.msra.mxu0 0.0
    %986 = vmatprep.subr.mxu0 0.0
    %987 = vmatpush1.xpose.msra.mxu0 0.0
    %988 = vmatprep.subr.mxu0 0.0
    %989 = vmatpush1.xpose.msra.mxu0 0.0
    %990 = vmatprep.subr.mxu0 0.0
    %991 = vmatpush1.xpose.msra.mxu0 0.0
    %992 = vmatprep.subr.mxu0 0.0
    %993 = vmatpush1.xpose.msra.mxu0 0.0
    %994 = vmatprep.subr.mxu0 0.0
    %995 = vmatpush1.xpose.msra.mxu0 0.0
    %996 = vmatprep.subr.mxu0 0.0
    %997 = vmatpush1.xpose.msra.mxu0 0.0
    %998 = vmatprep.subr.mxu0 0.0
    %999 = vmatpush1.xpose.msra.mxu0 0.0
    %1000 = vmatprep.subr.mxu0 0.0
    %1001 = vmatpush1.xpose.msra.mxu0 0.0
    %1002 = vmatprep.subr.mxu0 0.0
    %1003 = vmatpush1.xpose.msra.mxu0 0.0
    %1004 = vmatprep.subr.mxu0 0.0
    %1005 = vmatpush1.xpose.msra.mxu0 0.0
    %1006 = vmatprep.subr.mxu0 0.0
    %1007 = vmatpush1.xpose.msra.mxu0 0.0
    %1008 = vmatprep.subr.mxu0 0.0
    %1009 = vmatpush1.xpose.msra.mxu0 0.0
    %1010 = vmatprep.subr.mxu0 0.0
    %1011 = vmatpush1.xpose.msra.mxu0 0.0
    %1012 = vmatprep.subr.mxu0 0.0
    %1013 = vmatpush1.xpose.msra.mxu0 0.0
    %1014 = vmatprep.subr.mxu0 0.0
    %1015 = vmatpush1.xpose.msra.mxu0 0.0
    %1016 = vmatprep.mubr.f32.mxu0 %v951
    %1017 = vmatmul.mubr.f32.gmra.mrb[0].mxu0 %v949
    %v1018 = vpop.f32.mrb[0].mxu0
    %v1019 = vadd.f32 0.0, %v1018
    %v1020 = vpop.f32.mrb[0].mxu0
    %1021 = vdwg.mxu0
    %v1022 = vrcp.pop %v1019
    %v1023 = vmul.f32 %v1019, %v1022
    %v1024 = vsub.f32 2.0, %v1023
    %v1025 = vmul.f32 %v1022, %v1024
    %v1027 = vsel %vm832, %v1025, 0
    %1029 = vmatprep.subr.mxu0 %v685
    %1030 = vmatpush1.msra.mxu0 %v684
    %1031 = vmatprep.subr.mxu0 %v687
    %1032 = vmatpush1.msra.mxu0 %v686
    %1033 = vmatprep.subr.mxu0 0.0
    %1034 = vmatpush1.msra.mxu0 0.0
    %1035 = vmatprep.subr.mxu0 0.0
    %1036 = vmatpush1.msra.mxu0 0.0
    %1037 = vmatprep.subr.mxu0 0.0
    %1038 = vmatpush1.msra.mxu0 0.0
    %1039 = vmatprep.subr.mxu0 0.0
    %1040 = vmatpush1.msra.mxu0 0.0
    %1041 = vmatprep.subr.mxu0 0.0
    %1042 = vmatpush1.msra.mxu0 0.0
    %1043 = vmatprep.subr.mxu0 0.0
    %1044 = vmatpush1.msra.mxu0 0.0
    %1045 = vmatprep.subr.mxu0 0.0
    %1046 = vmatpush1.msra.mxu0 0.0
    %1047 = vmatprep.subr.mxu0 0.0
    %1048 = vmatpush1.msra.mxu0 0.0
    %1049 = vmatprep.subr.mxu0 0.0
    %1050 = vmatpush1.msra.mxu0 0.0
    %1051 = vmatprep.subr.mxu0 0.0
    %1052 = vmatpush1.msra.mxu0 0.0
    %1053 = vmatprep.subr.mxu0 0.0
    %1054 = vmatpush1.msra.mxu0 0.0
    %1055 = vmatprep.subr.mxu0 0.0
    %1056 = vmatpush1.msra.mxu0 0.0
    %1057 = vmatprep.subr.mxu0 0.0
    %1058 = vmatpush1.msra.mxu0 0.0
    %1059 = vmatprep.subr.mxu0 0.0
    %1060 = vmatpush1.msra.mxu0 0.0
    %1061 = vmatprep.subr.mxu0 0.0
    %1062 = vmatpush1.msra.mxu0 0.0
    %1063 = vmatprep.subr.mxu0 0.0
    %1064 = vmatpush1.msra.mxu0 0.0
    %1065 = vmatprep.subr.mxu0 0.0
    %1066 = vmatpush1.msra.mxu0 0.0
    %1067 = vmatprep.subr.mxu0 0.0
    %1068 = vmatpush1.msra.mxu0 0.0
    %1069 = vmatprep.subr.mxu0 0.0
    %1070 = vmatpush1.msra.mxu0 0.0
    %1071 = vmatprep.subr.mxu0 0.0
    %1072 = vmatpush1.msra.mxu0 0.0
    %1073 = vmatprep.subr.mxu0 0.0
    %1074 = vmatpush1.msra.mxu0 0.0
    %1075 = vmatprep.subr.mxu0 0.0
    %1076 = vmatpush1.msra.mxu0 0.0
    %1077 = vmatprep.subr.mxu0 0.0
    %1078 = vmatpush1.msra.mxu0 0.0
    %1079 = vmatprep.subr.mxu0 0.0
    %1080 = vmatpush1.msra.mxu0 0.0
    %1081 = vmatprep.subr.mxu0 0.0
    %1082 = vmatpush1.msra.mxu0 0.0
    %1083 = vmatprep.subr.mxu0 0.0
    %1084 = vmatpush1.msra.mxu0 0.0
    %1085 = vmatprep.subr.mxu0 0.0
    %1086 = vmatpush1.msra.mxu0 0.0
    %1087 = vmatprep.subr.mxu0 0.0
    %1088 = vmatpush1.msra.mxu0 0.0
    %1089 = vmatprep.subr.mxu0 0.0
    %1090 = vmatpush1.msra.mxu0 0.0
    %1091 = vmatprep.subr.mxu0 0.0
    %1092 = vmatpush1.msra.mxu0 0.0
    %1093 = vmatprep.mubr.f32.mxu0 0.0
    %1094 = vmatmul.mubr.f32.gmra.mrb[0].mxu0 %v1027
    %v1095 = vpop.f32.mrb[0].mxu0
    %v1096 = vadd.f32 0.0, %v1095
    %v1097 = vpop.f32.mrb[0].mxu0
    %v1098 = vadd.f32 0.0, %v1097
    %1099 = vdwg.mxu0
    %v1100 = vmul.f32 %v949, %v1096
    %v1101 = vmul.f32 %v951, %v1098
    %v1104 = vcombine.low %v1100, %v1101
    %v1106 = vunpack.c.l.s4 1983009808
    %v1107 = vunpack.c.0.s8 %v1106
    %v1108 = vlaneseq
    %v1109 = vshrl.u32 %v1108, 7
    %v1110 = vsub.s32 %v1107, %v1109
    %v1111 = vrot.slane %v1104, %v1110
    %1113 = vst [vmem:[#allocation13] sm:$0xf] %v1111
    // Predicated region
    $region74: #{tpu_custom_call.1} parent=1 // pred_check
      _
    $region75: #{tpu_custom_call.1} parent=1 // pred_check_branch
      %1115 = sbr.rel (0) target = $region77
    $region76: #{tpu_custom_call.1} parent=1 // pred_region
      %s1117 = ssub.s32 64, 64
      %1118 = vsyncadd [#allocation4], %s1117
      %s1120 = sshll.u32 [#allocation13], 4
      %s1121 = int_to_ptr.vmem [resolvable:$true] %s1120
      %1123 = dma.vmem_to_hbm [thread:$0]  %s1121, 64, %s12, [#allocation4]
    $region77: #{tpu_custom_call.1} parent=1 // pred_fallthru
      _
    // Predicated region
    $region78: #{tpu_custom_call.1} parent=1 // pred_check
      _
    $region79: #{tpu_custom_call.1} parent=1 // pred_check_branch
      %1125 = sbr.rel (0) target = $region81
    $region80: #{tpu_custom_call.1} parent=1 // pred_region
      %1126 = dma.done [#allocation4], 64
    $region81: #{tpu_custom_call.1} parent=1 // pred_fallthru
      _
    %1127 = vsyncpa [#allocation3], 1
    %1128 = vsyncpa [#allocation6], 1
    %1129 = vsyncpa [#allocation9], 1
    %1130 = vsyncpa [#allocation12], 1
    %1131 = vsyncpa [#allocation4], 1

// kernel: tpu_custom_call.1
$region0: #{tpu_custom_call.1}
  #allocation0 [shape = 'u32[]', space=smem, size = 0x4, offset = 0x4, fixed_abs, tag = 'smem constant byte address 0x4 - core index']
  #allocation1 [shape = 'u32[144,128]{1,0:T(1,128)}', space=vmem, size = 0x12000, scoped, tag = 'internal scratch']
  %s0 = inlined_call_operand.hbm [shape: f32[2,32], index: 0, kind: input, shape index: {}]
  %s1 = inlined_call_operand.hbm [shape: bf16[32,128], index: 1, kind: input, shape index: {}]
  %s2 = inlined_call_operand.vmem [shape: f32[1,128], index: 2, kind: input, shape index: {}]
  %s3 = inlined_call_operand.hbm [shape: bf16[128,128], index: 3, kind: input, shape index: {}]
  %s4 = inlined_call_operand.vmem [shape: f32[1,128], index: 4, kind: input, shape index: {}]
  %s5 = inlined_call_operand.hbm [shape: bf16[128,128], index: 5, kind: input, shape index: {}]
  %s6 = inlined_call_operand.vmem [shape: f32[1,128], index: 6, kind: input, shape index: {}]
  %s7 = inlined_call_operand.hbm [shape: bf16[128,128], index: 7, kind: input, shape index: {}]
  %s8 = inlined_call_operand.vmem [shape: f32[1,128], index: 8, kind: input, shape index: {}]
  %s9 = inlined_call_operand.hbm [shape: bf16[128,256], index: 9, kind: input, shape index: {}]
  %s10 = inlined_call_operand.vmem [shape: f32[1,256], index: 10, kind: input, shape index: {}]
  %s11 = inlined_call_operand.vmem [shape: bf16[16,256], index: 11, kind: input, shape index: {}]
  %s12 = inlined_call_operand.hbm [shape: f32[2,256], index: 12, kind: output, shape index: {}]
  %s13 = sld [smem:[#allocation0]]
  $region82: #{tpu_custom_call.1} parent=0
    _
  %s15 = ssub.s32 1, %s13
  %s16 = scalar_select 0, %s15, %s13
  $region1: #{tpu_custom_call.1} parent=0
    #allocation2 [shape = 'u8[1024]{0}', space=vmem, size = 0x400, scoped, tag = 'input window, operand 0, single buffered']
    #allocation3 [shape = 's32[1]{0}', space=sflag, size = 0x4, scoped, tag = 'scoped memory for tpu_custom_call.1']
    #allocation4 [shape = 's32[1]{0}', space=sflag, size = 0x4, scoped, tag = 'scoped memory for tpu_custom_call.1']
    #allocation5 [shape = 'u8[8192]{0}', space=vmem, size = 0x2000, scoped, tag = 'input window, operand 1, single buffered']
    #allocation6 [shape = 's32[1]{0}', space=sflag, size = 0x4, scoped, tag = 'scoped memory for tpu_custom_call.1']
    #allocation7 [shape = 'u8[32768]{0}', space=vmem, size = 0x8000, scoped, tag = 'input window, operand 3, single buffered']
    #allocation8 [shape = 'u8[32768]{0}', space=vmem, size = 0x8000, scoped, tag = 'input window, operand 5, single buffered']
    #allocation9 [shape = 's32[1]{0}', space=sflag, size = 0x4, scoped, tag = 'scoped memory for tpu_custom_call.1']
    #allocation10 [shape = 'u8[32768]{0}', space=vmem, size = 0x8000, scoped, tag = 'input window, operand 7, single buffered']
    #allocation11 [shape = 'u8[65536]{0}', space=vmem, size = 0x10000, scoped, tag = 'input window, operand 9, single buffered']
    #allocation12 [shape = 's32[1]{0}', space=sflag, size = 0x4, scoped, tag = 'scoped memory for tpu_custom_call.1']
    #allocation13 [shape = 'u8[2048]{0}', space=vmem, size = 0x800, scoped, tag = 'output window, operand 0, single buffered']
    %17 = vsyncpa [#allocation3], 0
    %18 = vsyncpa [#allocation6], 0
    %19 = vsyncpa [#allocation9], 0
    %20 = vsyncpa [#allocation12], 0
    %21 = vsyncpa [#allocation4], 0
    // Predicated region
    $region2: #{tpu_custom_call.1} parent=1 // pred_check
      _
    $region3: #{tpu_custom_call.1} parent=1 // pred_check_branch
      %23 = sbr.rel (0) target = $region5
    $region4: #{tpu_custom_call.1} parent=1 // pred_region
      %s25 = ssub.s32 32, 32
      %26 = vsyncadd [#allocation3], %s25
      %s28 = sshll.u32 [#allocation2], 4
      %s29 = int_to_ptr.vmem [resolvable:$true] %s28
      %31 = dma.hbm_to_vmem [thread:$0]  %s0, 32, %s29, [#allocation3]
    $region5: #{tpu_custom_call.1} parent=1 // pred_fallthru
      _
    // Predicated region
    $region6: #{tpu_custom_call.1} parent=1 // pred_check
      _
    $region7: #{tpu_custom_call.1} parent=1 // pred_check_branch
      %33 = sbr.rel (0) target = $region9
    $region8: #{tpu_custom_call.1} parent=1 // pred_region
      %s35 = ssub.s32 256, 256
      %36 = vsyncadd [#allocation6], %s35
      %s37 = sshll.u32 [#allocation5], 4
      %s38 = int_to_ptr.vmem [resolvable:$true] %s37
      %43 = dma.hbm_to_vmem [thread:$0]  %s1, 256, %s38, [#allocation6], 64, 64, 4
    $region9: #{tpu_custom_call.1} parent=1 // pred_fallthru
      _
    // Predicated region
    $region10: #{tpu_custom_call.1} parent=1 // pred_check
      _
    $region11: #{tpu_custom_call.1} parent=1 // pred_check_branch
      %45 = sbr.rel (0) target = $region13
    $region12: #{tpu_custom_call.1} parent=1 // pred_region
      _
    $region13: #{tpu_custom_call.1} parent=1 // pred_fallthru
      _
    // Predicated region
    $region14: #{tpu_custom_call.1} parent=1 // pred_check
      _
    $region15: #{tpu_custom_call.1} parent=1 // pred_check_branch
      %47 = sbr.rel (0) target = $region17
    $region16: #{tpu_custom_call.1} parent=1 // pred_region
      %s49 = ssub.s32 1024, 1024
      %50 = vsyncadd [#allocation6], %s49
      %s51 = sshll.u32 [#allocation7], 4
      %s52 = int_to_ptr.vmem [resolvable:$true] %s51
      %57 = dma.hbm_to_vmem [thread:$0]  %s3, 1024, %s52, [#allocation6], 64, 64, 4
    $region17: #{tpu_custom_call.1} parent=1 // pred_fallthru
      _
    // Predicated region
    $region18: #{tpu_custom_call.1} parent=1 // pred_check
      _
    $region19: #{tpu_custom_call.1} parent=1 // pred_check_branch
      %59 = sbr.rel (0) target = $region21
    $region20: #{tpu_custom_call.1} parent=1 // pred_region
      _
    $region21: #{tpu_custom_call.1} parent=1 // pred_fallthru
      _
    // Predicated region
    $region22: #{tpu_custom_call.1} parent=1 // pred_check
      _
    $region23: #{tpu_custom_call.1} parent=1 // pred_check_branch
      %61 = sbr.rel (0) target = $region25
    $region24: #{tpu_custom_call.1} parent=1 // pred_region
      %s63 = ssub.s32 1024, 1024
      %64 = vsyncadd [#allocation9], %s63
      %s65 = sshll.u32 [#allocation8], 4
      %s66 = int_to_ptr.vmem [resolvable:$true] %s65
      %71 = dma.hbm_to_vmem [thread:$0]  %s5, 1024, %s66, [#allocation9], 64, 64, 4
    $region25: #{tpu_custom_call.1} parent=1 // pred_fallthru
      _
    // Predicated region
    $region26: #{tpu_custom_call.1} parent=1 // pred_check
      _
    $region27: #{tpu_custom_call.1} parent=1 // pred_check_branch
      %73 = sbr.rel (0) target = $region29
    $region28: #{tpu_custom_call.1} parent=1 // pred_region
      _
    $region29: #{tpu_custom_call.1} parent=1 // pred_fallthru
      _
    // Predicated region
    $region30: #{tpu_custom_call.1} parent=1 // pred_check
      _
    $region31: #{tpu_custom_call.1} parent=1 // pred_check_branch
      %75 = sbr.rel (0) target = $region33
    $region32: #{tpu_custom_call.1} parent=1 // pred_region
      %s77 = ssub.s32 1024, 1024
      %78 = vsyncadd [#allocation9], %s77
      %s79 = sshll.u32 [#allocation10], 4
      %s80 = int_to_ptr.vmem [resolvable:$true] %s79
      %85 = dma.hbm_to_vmem [thread:$0]  %s7, 1024, %s80, [#allocation9], 64, 64, 4
    $region33: #{tpu_custom_call.1} parent=1 // pred_fallthru
      _
    // Predicated region
    $region34: #{tpu_custom_call.1} parent=1 // pred_check
      _
    $region35: #{tpu_custom_call.1} parent=1 // pred_check_branch
      %87 = sbr.rel (0) target = $region37
    $region36: #{tpu_custom_call.1} parent=1 // pred_region
      _
    $region37: #{tpu_custom_call.1} parent=1 // pred_fallthru
      _
    // Predicated region
    $region38: #{tpu_custom_call.1} parent=1 // pred_check
      _
    $region39: #{tpu_custom_call.1} parent=1 // pred_check_branch
      %89 = sbr.rel (0) target = $region41
    $region40: #{tpu_custom_call.1} parent=1 // pred_region
      %s91 = ssub.s32 2048, 2048
      %92 = vsyncadd [#allocation12], %s91
      %s93 = sshll.u32 [#allocation11], 4
      %s94 = int_to_ptr.vmem [resolvable:$true] %s93
      %99 = dma.hbm_to_vmem [thread:$0]  %s9, 2048, %s94, [#allocation12], 128, 128, 8
    $region41: #{tpu_custom_call.1} parent=1 // pred_fallthru
      _
    // Predicated region
    $region42: #{tpu_custom_call.1} parent=1 // pred_check
      _
    $region43: #{tpu_custom_call.1} parent=1 // pred_check_branch
      %101 = sbr.rel (0) target = $region45
    $region44: #{tpu_custom_call.1} parent=1 // pred_region
      _
    $region45: #{tpu_custom_call.1} parent=1 // pred_fallthru
      _
    // Predicated region
    $region46: #{tpu_custom_call.1} parent=1 // pred_check
      _
    $region47: #{tpu_custom_call.1} parent=1 // pred_check_branch
      %103 = sbr.rel (0) target = $region49
    $region48: #{tpu_custom_call.1} parent=1 // pred_region
      _
    $region49: #{tpu_custom_call.1} parent=1 // pred_fallthru
      _
    // Predicated region
    $region50: #{tpu_custom_call.1} parent=1 // pred_check
      _
    $region51: #{tpu_custom_call.1} parent=1 // pred_check_branch
      %105 = sbr.rel (0) target = $region53
    $region52: #{tpu_custom_call.1} parent=1 // pred_region
      %106 = dma.done [#allocation3], 32
    $region53: #{tpu_custom_call.1} parent=1 // pred_fallthru
      _
    // Predicated region
    $region54: #{tpu_custom_call.1} parent=1 // pred_check
      _
    $region55: #{tpu_custom_call.1} parent=1 // pred_check_branch
      %108 = sbr.rel (0) target = $region57
    $region56: #{tpu_custom_call.1} parent=1 // pred_region
      %109 = dma.done [#allocation6], 256
    $region57: #{tpu_custom_call.1} parent=1 // pred_fallthru
      _
    // Predicated region
    $region58: #{tpu_custom_call.1} parent=1 // pred_check
      _
    $region59: #{tpu_custom_call.1} parent=1 // pred_check_branch
      %111 = sbr.rel (0) target = $region61
    $region60: #{tpu_custom_call.1} parent=1 // pred_region
      %112 = dma.done [#allocation6], 1024
    $region61: #{tpu_custom_call.1} parent=1 // pred_fallthru
      _
    // Predicated region
    $region62: #{tpu_custom_call.1} parent=1 // pred_check
      _
    $region63: #{tpu_custom_call.1} parent=1 // pred_check_branch
      %114 = sbr.rel (0) target = $region65
    $region64: #{tpu_custom_call.1} parent=1 // pred_region
      %115 = dma.done [#allocation9], 1024
    $region65: #{tpu_custom_call.1} parent=1 // pred_fallthru
      _
    // Predicated region
    $region66: #{tpu_custom_call.1} parent=1 // pred_check
      _
    $region67: #{tpu_custom_call.1} parent=1 // pred_check_branch
      %117 = sbr.rel (0) target = $region69
    $region68: #{tpu_custom_call.1} parent=1 // pred_region
      %118 = dma.done [#allocation9], 1024
    $region69: #{tpu_custom_call.1} parent=1 // pred_fallthru
      _
    // Predicated region
    $region70: #{tpu_custom_call.1} parent=1 // pred_check
      _
    $region71: #{tpu_custom_call.1} parent=1 // pred_check_branch
      %120 = sbr.rel (0) target = $region73
    $region72: #{tpu_custom_call.1} parent=1 // pred_region
      %121 = dma.done [#allocation12], 2048
    $region73: #{tpu_custom_call.1} parent=1 // pred_fallthru
      _
    %v123 = vld [vmem:[#allocation2] sm:$0x3]
    %v124 = vpack.c.bf16 %v123, %v123
    %v125 = vld [vmem:[#allocation5] sm:$0xf]
    %v126 = vld [vmem:[#allocation5 + $0x4] sm:$0xf]
    %v127 = vld [vmem:[#allocation5 + $0x8] sm:$0xf]
    %v128 = vld [vmem:[#allocation5 + $0xc] sm:$0xf]
    %v129 = vld [vmem:[%s2] sm:$0x1]
    %v131 = vlaneseq
    %v132 = vshrl.u32 %v131, 7
    %v133 = vsub.s32 0, %v132
    %v134 = vrot.slane %v129, %v133
    %v140 = vunpack.c.l.b16 %v125
    %v141 = vunpack.c.l.b16 %v126
    %v142 = vunpack.c.l.b16 %v127
    %v143 = vunpack.c.l.b16 %v128
    %v144 = vpack.c.b16 %v141, %v140
    %v145 = vpack.c.b16 %v143, %v142
    %vm148 = vcmask 261120
    %v150 = vsel %vm148, %v124, 0
    %152 = vmatprep.subr.bf16.mxu0 0
    %153 = vmatpush1.bf16.msra.mxu0 %v144
    %154 = vmatprep.subr.bf16.mxu0 0
    %155 = vmatpush1.bf16.msra.mxu0 %v145
    %156 = vmatprep.subr.bf16.mxu0 0
    %157 = vmatpush1.bf16.msra.mxu0 0
    %158 = vmatprep.subr.bf16.mxu0 0
    %159 = vmatpush1.bf16.msra.mxu0 0
    %160 = vmatprep.subr.bf16.mxu0 0
    %161 = vmatpush1.bf16.msra.mxu0 0
    %162 = vmatprep.subr.bf16.mxu0 0
    %163 = vmatpush1.bf16.msra.mxu0 0
    %164 = vmatprep.subr.bf16.mxu0 0
    %165 = vmatpush1.bf16.msra.mxu0 0
    %166 = vmatprep.subr.bf16.mxu0 0
    %167 = vmatpush1.bf16.msra.mxu0 0
    %168 = vmatprep.subr.bf16.mxu0 0
    %169 = vmatpush1.bf16.msra.mxu0 0
    %170 = vmatprep.subr.bf16.mxu0 0
    %171 = vmatpush1.bf16.msra.mxu0 0
    %172 = vmatprep.subr.bf16.mxu0 0
    %173 = vmatpush1.bf16.msra.mxu0 0
    %174 = vmatprep.subr.bf16.mxu0 0
    %175 = vmatpush1.bf16.msra.mxu0 0
    %176 = vmatprep.subr.bf16.mxu0 0
    %177 = vmatpush1.bf16.msra.mxu0 0
    %178 = vmatprep.subr.bf16.mxu0 0
    %179 = vmatpush1.bf16.msra.mxu0 0
    %180 = vmatprep.subr.bf16.mxu0 0
    %181 = vmatpush1.bf16.msra.mxu0 0
    %182 = vmatprep.subr.bf16.mxu0 0
    %183 = vmatpush1.bf16.msra.mxu0 0
    %184 = vmatprep.mubr.bf16.mxu0 0
    %185 = vmatmul.mubr.bf16.gmra.mrb[0].mxu0 %v150
    %v186 = vpop.f32.mrb[0].mxu0
    %v187 = vadd.f32 %v134, %v186
    %v188 = vpop.f32.mrb[0].mxu0
    %v189 = vpop.f32.mrb[0].mxu0
    %v190 = vpop.f32.mrb[0].mxu0
    %191 = vdwg.mxu0
    %v192 = vmax.f32 %v187, 0.0
    %v193 = vpack.c.bf16 %v192, %v192
    %v194 = vld [vmem:[#allocation7] sm:$0xf]
    %v195 = vld [vmem:[#allocation7 + $0x4] sm:$0xf]
    %v196 = vld [vmem:[#allocation7 + $0x8] sm:$0xf]
    %v197 = vld [vmem:[#allocation7 + $0xc] sm:$0xf]
    %v198 = vld [vmem:[#allocation7 + $0x10] sm:$0xf]
    %v199 = vld [vmem:[#allocation7 + $0x14] sm:$0xf]
    %v200 = vld [vmem:[#allocation7 + $0x18] sm:$0xf]
    %v201 = vld [vmem:[#allocation7 + $0x1c] sm:$0xf]
    %v202 = vld [vmem:[#allocation7 + $0x20] sm:$0xf]
    %v203 = vld [vmem:[#allocation7 + $0x24] sm:$0xf]
    %v204 = vld [vmem:[#allocation7 + $0x28] sm:$0xf]
    %v205 = vld [vmem:[#allocation7 + $0x2c] sm:$0xf]
    %v206 = vld [vmem:[#allocation7 + $0x30] sm:$0xf]
    %v207 = vld [vmem:[#allocation7 + $0x34] sm:$0xf]
    %v208 = vld [vmem:[#allocation7 + $0x38] sm:$0xf]
    %v209 = vld [vmem:[#allocation7 + $0x3c] sm:$0xf]
    %v210 = vld [vmem:[%s4] sm:$0x1]
    %v212 = vlaneseq
    %v213 = vshrl.u32 %v212, 7
    %v214 = vsub.s32 0, %v213
    %v215 = vrot.slane %v210, %v214
    %v233 = vunpack.c.l.b16 %v194
    %v234 = vunpack.c.l.b16 %v195
    %v235 = vunpack.c.l.b16 %v196
    %v236 = vunpack.c.l.b16 %v197
    %v237 = vunpack.c.l.b16 %v198
    %v238 = vunpack.c.l.b16 %v199
    %v239 = vunpack.c.l.b16 %v200
    %v240 = vunpack.c.l.b16 %v201
    %v241 = vunpack.c.l.b16 %v202
    %v242 = vunpack.c.l.b16 %v203
    %v243 = vunpack.c.l.b16 %v204
    %v244 = vunpack.c.l.b16 %v205
    %v245 = vunpack.c.l.b16 %v206
    %v246 = vunpack.c.l.b16 %v207
    %v247 = vunpack.c.l.b16 %v208
    %v248 = vunpack.c.l.b16 %v209
    %v249 = vpack.c.b16 %v234, %v233
    %v250 = vpack.c.b16 %v236, %v235
    %v251 = vpack.c.b16 %v238, %v237
    %v252 = vpack.c.b16 %v240, %v239
    %v253 = vpack.c.b16 %v242, %v241
    %v254 = vpack.c.b16 %v244, %v243
    %v255 = vpack.c.b16 %v246, %v245
    %v256 = vpack.c.b16 %v248, %v247
    %265 = vmatprep.subr.bf16.mxu0 0
    %266 = vmatpush1.bf16.msra.mxu0 %v249
    %267 = vmatprep.subr.bf16.mxu0 0
    %268 = vmatpush1.bf16.msra.mxu0 %v250
    %269 = vmatprep.subr.bf16.mxu0 0
    %270 = vmatpush1.bf16.msra.mxu0 %v251
    %271 = vmatprep.subr.bf16.mxu0 0
    %272 = vmatpush1.bf16.msra.mxu0 %v252
    %273 = vmatprep.subr.bf16.mxu0 0
    %274 = vmatpush1.bf16.msra.mxu0 %v253
    %275 = vmatprep.subr.bf16.mxu0 0
    %276 = vmatpush1.bf16.msra.mxu0 %v254
    %277 = vmatprep.subr.bf16.mxu0 0
    %278 = vmatpush1.bf16.msra.mxu0 %v255
    %279 = vmatprep.subr.bf16.mxu0 0
    %280 = vmatpush1.bf16.msra.mxu0 %v256
    %281 = vmatprep.subr.bf16.mxu0 0
    %282 = vmatpush1.bf16.msra.mxu0 0
    %283 = vmatprep.subr.bf16.mxu0 0
    %284 = vmatpush1.bf16.msra.mxu0 0
    %285 = vmatprep.subr.bf16.mxu0 0
    %286 = vmatpush1.bf16.msra.mxu0 0
    %287 = vmatprep.subr.bf16.mxu0 0
    %288 = vmatpush1.bf16.msra.mxu0 0
    %289 = vmatprep.subr.bf16.mxu0 0
    %290 = vmatpush1.bf16.msra.mxu0 0
    %291 = vmatprep.subr.bf16.mxu0 0
    %292 = vmatpush1.bf16.msra.mxu0 0
    %293 = vmatprep.subr.bf16.mxu0 0
    %294 = vmatpush1.bf16.msra.mxu0 0
    %295 = vmatprep.subr.bf16.mxu0 0
    %296 = vmatpush1.bf16.msra.mxu0 0
    %297 = vmatprep.mubr.bf16.mxu0 0
    %298 = vmatmul.mubr.bf16.gmra.mrb[0].mxu0 %v193
    %v299 = vpop.f32.mrb[0].mxu0
    %v300 = vadd.f32 %v215, %v299
    %v301 = vpop.f32.mrb[0].mxu0
    %v302 = vpop.f32.mrb[0].mxu0
    %v303 = vpop.f32.mrb[0].mxu0
    %304 = vdwg.mxu0
    %v305 = vmax.f32 %v300, 0.0
    %v306 = vpack.c.bf16 %v305, %v305
    %v307 = vld [vmem:[#allocation8] sm:$0xf]
    %v308 = vld [vmem:[#allocation8 + $0x4] sm:$0xf]
    %v309 = vld [vmem:[#allocation8 + $0x8] sm:$0xf]
    %v310 = vld [vmem:[#allocation8 + $0xc] sm:$0xf]
    %v311 = vld [vmem:[#allocation8 + $0x10] sm:$0xf]
    %v312 = vld [vmem:[#allocation8 + $0x14] sm:$0xf]
    %v313 = vld [vmem:[#allocation8 + $0x18] sm:$0xf]
    %v314 = vld [vmem:[#allocation8 + $0x1c] sm:$0xf]
    %v315 = vld [vmem:[#allocation8 + $0x20] sm:$0xf]
    %v316 = vld [vmem:[#allocation8 + $0x24] sm:$0xf]
    %v317 = vld [vmem:[#allocation8 + $0x28] sm:$0xf]
    %v318 = vld [vmem:[#allocation8 + $0x2c] sm:$0xf]
    %v319 = vld [vmem:[#allocation8 + $0x30] sm:$0xf]
    %v320 = vld [vmem:[#allocation8 + $0x34] sm:$0xf]
    %v321 = vld [vmem:[#allocation8 + $0x38] sm:$0xf]
    %v322 = vld [vmem:[#allocation8 + $0x3c] sm:$0xf]
    %v323 = vld [vmem:[%s6] sm:$0x1]
    %v325 = vlaneseq
    %v326 = vshrl.u32 %v325, 7
    %v327 = vsub.s32 0, %v326
    %v328 = vrot.slane %v323, %v327
    %v346 = vunpack.c.l.b16 %v307
    %v347 = vunpack.c.l.b16 %v308
    %v348 = vunpack.c.l.b16 %v309
    %v349 = vunpack.c.l.b16 %v310
    %v350 = vunpack.c.l.b16 %v311
    %v351 = vunpack.c.l.b16 %v312
    %v352 = vunpack.c.l.b16 %v313
    %v353 = vunpack.c.l.b16 %v314
    %v354 = vunpack.c.l.b16 %v315
    %v355 = vunpack.c.l.b16 %v316
    %v356 = vunpack.c.l.b16 %v317
    %v357 = vunpack.c.l.b16 %v318
    %v358 = vunpack.c.l.b16 %v319
    %v359 = vunpack.c.l.b16 %v320
    %v360 = vunpack.c.l.b16 %v321
    %v361 = vunpack.c.l.b16 %v322
    %v362 = vpack.c.b16 %v347, %v346
    %v363 = vpack.c.b16 %v349, %v348
    %v364 = vpack.c.b16 %v351, %v350
    %v365 = vpack.c.b16 %v353, %v352
    %v366 = vpack.c.b16 %v355, %v354
    %v367 = vpack.c.b16 %v357, %v356
    %v368 = vpack.c.b16 %v359, %v358
    %v369 = vpack.c.b16 %v361, %v360
    %378 = vmatprep.subr.bf16.mxu0 0
    %379 = vmatpush1.bf16.msra.mxu0 %v362
    %380 = vmatprep.subr.bf16.mxu0 0
    %381 = vmatpush1.bf16.msra.mxu0 %v363
    %382 = vmatprep.subr.bf16.mxu0 0
    %383 = vmatpush1.bf16.msra.mxu0 %v364
    %384 = vmatprep.subr.bf16.mxu0 0
    %385 = vmatpush1.bf16.msra.mxu0 %v365
    %386 = vmatprep.subr.bf16.mxu0 0
    %387 = vmatpush1.bf16.msra.mxu0 %v366
    %388 = vmatprep.subr.bf16.mxu0 0
    %389 = vmatpush1.bf16.msra.mxu0 %v367
    %390 = vmatprep.subr.bf16.mxu0 0
    %391 = vmatpush1.bf16.msra.mxu0 %v368
    %392 = vmatprep.subr.bf16.mxu0 0
    %393 = vmatpush1.bf16.msra.mxu0 %v369
    %394 = vmatprep.subr.bf16.mxu0 0
    %395 = vmatpush1.bf16.msra.mxu0 0
    %396 = vmatprep.subr.bf16.mxu0 0
    %397 = vmatpush1.bf16.msra.mxu0 0
    %398 = vmatprep.subr.bf16.mxu0 0
    %399 = vmatpush1.bf16.msra.mxu0 0
    %400 = vmatprep.subr.bf16.mxu0 0
    %401 = vmatpush1.bf16.msra.mxu0 0
    %402 = vmatprep.subr.bf16.mxu0 0
    %403 = vmatpush1.bf16.msra.mxu0 0
    %404 = vmatprep.subr.bf16.mxu0 0
    %405 = vmatpush1.bf16.msra.mxu0 0
    %406 = vmatprep.subr.bf16.mxu0 0
    %407 = vmatpush1.bf16.msra.mxu0 0
    %408 = vmatprep.subr.bf16.mxu0 0
    %409 = vmatpush1.bf16.msra.mxu0 0
    %410 = vmatprep.mubr.bf16.mxu0 0
    %411 = vmatmul.mubr.bf16.gmra.mrb[0].mxu0 %v306
    %v412 = vpop.f32.mrb[0].mxu0
    %v413 = vadd.f32 %v328, %v412
    %v414 = vpop.f32.mrb[0].mxu0
    %v415 = vpop.f32.mrb[0].mxu0
    %v416 = vpop.f32.mrb[0].mxu0
    %417 = vdwg.mxu0
    %v418 = vmax.f32 %v413, 0.0
    %v419 = vpack.c.bf16 %v418, %v418
    %v420 = vld [vmem:[#allocation10] sm:$0xf]
    %v421 = vld [vmem:[#allocation10 + $0x4] sm:$0xf]
    %v422 = vld [vmem:[#allocation10 + $0x8] sm:$0xf]
    %v423 = vld [vmem:[#allocation10 + $0xc] sm:$0xf]
    %v424 = vld [vmem:[#allocation10 + $0x10] sm:$0xf]
    %v425 = vld [vmem:[#allocation10 + $0x14] sm:$0xf]
    %v426 = vld [vmem:[#allocation10 + $0x18] sm:$0xf]
    %v427 = vld [vmem:[#allocation10 + $0x1c] sm:$0xf]
    %v428 = vld [vmem:[#allocation10 + $0x20] sm:$0xf]
    %v429 = vld [vmem:[#allocation10 + $0x24] sm:$0xf]
    %v430 = vld [vmem:[#allocation10 + $0x28] sm:$0xf]
    %v431 = vld [vmem:[#allocation10 + $0x2c] sm:$0xf]
    %v432 = vld [vmem:[#allocation10 + $0x30] sm:$0xf]
    %v433 = vld [vmem:[#allocation10 + $0x34] sm:$0xf]
    %v434 = vld [vmem:[#allocation10 + $0x38] sm:$0xf]
    %v435 = vld [vmem:[#allocation10 + $0x3c] sm:$0xf]
    %v436 = vld [vmem:[%s8] sm:$0x1]
    %v438 = vlaneseq
    %v439 = vshrl.u32 %v438, 7
    %v440 = vsub.s32 0, %v439
    %v441 = vrot.slane %v436, %v440
    %v459 = vunpack.c.l.b16 %v420
    %v460 = vunpack.c.l.b16 %v421
    %v461 = vunpack.c.l.b16 %v422
    %v462 = vunpack.c.l.b16 %v423
    %v463 = vunpack.c.l.b16 %v424
    %v464 = vunpack.c.l.b16 %v425
    %v465 = vunpack.c.l.b16 %v426
    %v466 = vunpack.c.l.b16 %v427
    %v467 = vunpack.c.l.b16 %v428
    %v468 = vunpack.c.l.b16 %v429
    %v469 = vunpack.c.l.b16 %v430
    %v470 = vunpack.c.l.b16 %v431
    %v471 = vunpack.c.l.b16 %v432
    %v472 = vunpack.c.l.b16 %v433
    %v473 = vunpack.c.l.b16 %v434
    %v474 = vunpack.c.l.b16 %v435
    %v475 = vpack.c.b16 %v460, %v459
    %v476 = vpack.c.b16 %v462, %v461
    %v477 = vpack.c.b16 %v464, %v463
    %v478 = vpack.c.b16 %v466, %v465
    %v479 = vpack.c.b16 %v468, %v467
    %v480 = vpack.c.b16 %v470, %v469
    %v481 = vpack.c.b16 %v472, %v471
    %v482 = vpack.c.b16 %v474, %v473
    %491 = vmatprep.subr.bf16.mxu0 0
    %492 = vmatpush1.bf16.msra.mxu0 %v475
    %493 = vmatprep.subr.bf16.mxu0 0
    %494 = vmatpush1.bf16.msra.mxu0 %v476
    %495 = vmatprep.subr.bf16.mxu0 0
    %496 = vmatpush1.bf16.msra.mxu0 %v477
    %497 = vmatprep.subr.bf16.mxu0 0
    %498 = vmatpush1.bf16.msra.mxu0 %v478
    %499 = vmatprep.subr.bf16.mxu0 0
    %500 = vmatpush1.bf16.msra.mxu0 %v479
    %501 = vmatprep.subr.bf16.mxu0 0
    %502 = vmatpush1.bf16.msra.mxu0 %v480
    %503 = vmatprep.subr.bf16.mxu0 0
    %504 = vmatpush1.bf16.msra.mxu0 %v481
    %505 = vmatprep.subr.bf16.mxu0 0
    %506 = vmatpush1.bf16.msra.mxu0 %v482
    %507 = vmatprep.subr.bf16.mxu0 0
    %508 = vmatpush1.bf16.msra.mxu0 0
    %509 = vmatprep.subr.bf16.mxu0 0
    %510 = vmatpush1.bf16.msra.mxu0 0
    %511 = vmatprep.subr.bf16.mxu0 0
    %512 = vmatpush1.bf16.msra.mxu0 0
    %513 = vmatprep.subr.bf16.mxu0 0
    %514 = vmatpush1.bf16.msra.mxu0 0
    %515 = vmatprep.subr.bf16.mxu0 0
    %516 = vmatpush1.bf16.msra.mxu0 0
    %517 = vmatprep.subr.bf16.mxu0 0
    %518 = vmatpush1.bf16.msra.mxu0 0
    %519 = vmatprep.subr.bf16.mxu0 0
    %520 = vmatpush1.bf16.msra.mxu0 0
    %521 = vmatprep.subr.bf16.mxu0 0
    %522 = vmatpush1.bf16.msra.mxu0 0
    %523 = vmatprep.mubr.bf16.mxu0 0
    %524 = vmatmul.mubr.bf16.gmra.mrb[0].mxu0 %v419
    %v525 = vpop.f32.mrb[0].mxu0
    %v526 = vadd.f32 %v441, %v525
    %v527 = vpop.f32.mrb[0].mxu0
    %v528 = vpop.f32.mrb[0].mxu0
    %v529 = vpop.f32.mrb[0].mxu0
    %530 = vdwg.mxu0
    %v531 = vmax.f32 %v526, 0.0
    %v532 = vpack.c.bf16 %v531, %v531
    %v533 = vld [vmem:[#allocation11] sm:$0xff]
    %v534 = vld [vmem:[#allocation11 + $0x8] sm:$0xff]
    %v535 = vld [vmem:[#allocation11 + $0x10] sm:$0xff]
    %v536 = vld [vmem:[#allocation11 + $0x18] sm:$0xff]
    %v537 = vld [vmem:[#allocation11 + $0x20] sm:$0xff]
    %v538 = vld [vmem:[#allocation11 + $0x28] sm:$0xff]
    %v539 = vld [vmem:[#allocation11 + $0x30] sm:$0xff]
    %v540 = vld [vmem:[#allocation11 + $0x38] sm:$0xff]
    %v541 = vld [vmem:[#allocation11 + $0x40] sm:$0xff]
    %v542 = vld [vmem:[#allocation11 + $0x48] sm:$0xff]
    %v543 = vld [vmem:[#allocation11 + $0x50] sm:$0xff]
    %v544 = vld [vmem:[#allocation11 + $0x58] sm:$0xff]
    %v545 = vld [vmem:[#allocation11 + $0x60] sm:$0xff]
    %v546 = vld [vmem:[#allocation11 + $0x68] sm:$0xff]
    %v547 = vld [vmem:[#allocation11 + $0x70] sm:$0xff]
    %v548 = vld [vmem:[#allocation11 + $0x78] sm:$0xff]
    %v549 = vld [vmem:[%s10] sm:$0x3]
    %v551 = vlaneseq
    %v552 = vshrl.u32 %v551, 7
    %v553 = vsub.s32 0, %v552
    %v554 = vrot.slane %v549, %v553
    %v555 = vlaneseq
    %v556 = vshrl.u32 %v555, 7
    %v557 = vsub.s32 1, %v556
    %v558 = vrot.slane %v549, %v557
    %v577 = vunpack.c.l.b16 %v533
    %v578 = vunpack.c.h.b16 %v533
    %v579 = vunpack.c.l.b16 %v534
    %v580 = vunpack.c.h.b16 %v534
    %v581 = vunpack.c.l.b16 %v535
    %v582 = vunpack.c.h.b16 %v535
    %v583 = vunpack.c.l.b16 %v536
    %v584 = vunpack.c.h.b16 %v536
    %v585 = vunpack.c.l.b16 %v537
    %v586 = vunpack.c.h.b16 %v537
    %v587 = vunpack.c.l.b16 %v538
    %v588 = vunpack.c.h.b16 %v538
    %v589 = vunpack.c.l.b16 %v539
    %v590 = vunpack.c.h.b16 %v539
    %v591 = vunpack.c.l.b16 %v540
    %v592 = vunpack.c.h.b16 %v540
    %v593 = vunpack.c.l.b16 %v541
    %v594 = vunpack.c.h.b16 %v541
    %v595 = vunpack.c.l.b16 %v542
    %v596 = vunpack.c.h.b16 %v542
    %v597 = vunpack.c.l.b16 %v543
    %v598 = vunpack.c.h.b16 %v543
    %v599 = vunpack.c.l.b16 %v544
    %v600 = vunpack.c.h.b16 %v544
    %v601 = vunpack.c.l.b16 %v545
    %v602 = vunpack.c.h.b16 %v545
    %v603 = vunpack.c.l.b16 %v546
    %v604 = vunpack.c.h.b16 %v546
    %v605 = vunpack.c.l.b16 %v547
    %v606 = vunpack.c.h.b16 %v547
    %v607 = vunpack.c.l.b16 %v548
    %v608 = vunpack.c.h.b16 %v548
    %v609 = vpack.c.b16 %v579, %v577
    %v610 = vpack.c.b16 %v580, %v578
    %v611 = vpack.c.b16 %v583, %v581
    %v612 = vpack.c.b16 %v584, %v582
    %v613 = vpack.c.b16 %v587, %v585
    %v614 = vpack.c.b16 %v588, %v586
    %v615 = vpack.c.b16 %v591, %v589
    %v616 = vpack.c.b16 %v592, %v590
    %v617 = vpack.c.b16 %v595, %v593
    %v618 = vpack.c.b16 %v596, %v594
    %v619 = vpack.c.b16 %v599, %v597
    %v620 = vpack.c.b16 %v600, %v598
    %v621 = vpack.c.b16 %v603, %v601
    %v622 = vpack.c.b16 %v604, %v602
    %v623 = vpack.c.b16 %v607, %v605
    %v624 = vpack.c.b16 %v608, %v606
    %641 = vmatprep.subr.bf16.mxu0 %v610
    %642 = vmatpush1.bf16.msra.mxu0 %v609
    %643 = vmatprep.subr.bf16.mxu0 %v612
    %644 = vmatpush1.bf16.msra.mxu0 %v611
    %645 = vmatprep.subr.bf16.mxu0 %v614
    %646 = vmatpush1.bf16.msra.mxu0 %v613
    %647 = vmatprep.subr.bf16.mxu0 %v616
    %648 = vmatpush1.bf16.msra.mxu0 %v615
    %649 = vmatprep.subr.bf16.mxu0 %v618
    %650 = vmatpush1.bf16.msra.mxu0 %v617
    %651 = vmatprep.subr.bf16.mxu0 %v620
    %652 = vmatpush1.bf16.msra.mxu0 %v619
    %653 = vmatprep.subr.bf16.mxu0 %v622
    %654 = vmatpush1.bf16.msra.mxu0 %v621
    %655 = vmatprep.subr.bf16.mxu0 %v624
    %656 = vmatpush1.bf16.msra.mxu0 %v623
    %657 = vmatprep.subr.bf16.mxu0 0
    %658 = vmatpush1.bf16.msra.mxu0 0
    %659 = vmatprep.subr.bf16.mxu0 0
    %660 = vmatpush1.bf16.msra.mxu0 0
    %661 = vmatprep.subr.bf16.mxu0 0
    %662 = vmatpush1.bf16.msra.mxu0 0
    %663 = vmatprep.subr.bf16.mxu0 0
    %664 = vmatpush1.bf16.msra.mxu0 0
    %665 = vmatprep.subr.bf16.mxu0 0
    %666 = vmatpush1.bf16.msra.mxu0 0
    %667 = vmatprep.subr.bf16.mxu0 0
    %668 = vmatpush1.bf16.msra.mxu0 0
    %669 = vmatprep.subr.bf16.mxu0 0
    %670 = vmatpush1.bf16.msra.mxu0 0
    %671 = vmatprep.subr.bf16.mxu0 0
    %672 = vmatpush1.bf16.msra.mxu0 0
    %673 = vmatprep.mubr.bf16.mxu0 0
    %674 = vmatmul.mubr.bf16.gmra.mrb[0].mxu0 %v532
    %v675 = vpop.f32.mrb[0].mxu0
    %v676 = vadd.f32 %v554, %v675
    %v677 = vpop.f32.mrb[0].mxu0
    %v678 = vadd.f32 %v558, %v677
    %v679 = vpop.f32.mrb[0].mxu0
    %v680 = vpop.f32.mrb[0].mxu0
    %681 = vdwg.mxu0
    %v682 = vld [vmem:[%s11] sm:$0xff]
    %v683 = vld [vmem:[%s11 + $0x8] sm:$0xff]
    %v684 = vunpack.c.l.bf16 %v682
    %v685 = vunpack.c.h.bf16 %v682
    %v686 = vunpack.c.l.bf16 %v683
    %v687 = vunpack.c.h.bf16 %v683
    %689 = vrot.lane.b32.xlu0 %v676, 112
    %v690 = vpop.permute.xlu0 %689
    %692 = vrot.lane.b32.xlu0 %v676, 96
    %v693 = vpop.permute.xlu0 %692
    %695 = vrot.lane.b32.xlu0 %v676, 80
    %v696 = vpop.permute.xlu0 %695
    %698 = vrot.lane.b32.xlu0 %v676, 64
    %v699 = vpop.permute.xlu0 %698
    %701 = vrot.lane.b32.xlu0 %v676, 48
    %v702 = vpop.permute.xlu0 %701
    %704 = vrot.lane.b32.xlu0 %v676, 32
    %v705 = vpop.permute.xlu0 %704
    %707 = vrot.lane.b32.xlu0 %v676, 16
    %v708 = vpop.permute.xlu0 %707
    %711 = vrot.lane.b32.xlu0 %v678, 112
    %v712 = vpop.permute.xlu0 %711
    %714 = vrot.lane.b32.xlu0 %v678, 96
    %v715 = vpop.permute.xlu0 %714
    %717 = vrot.lane.b32.xlu0 %v678, 80
    %v718 = vpop.permute.xlu0 %717
    %720 = vrot.lane.b32.xlu0 %v678, 64
    %v721 = vpop.permute.xlu0 %720
    %723 = vrot.lane.b32.xlu0 %v678, 48
    %v724 = vpop.permute.xlu0 %723
    %726 = vrot.lane.b32.xlu0 %v678, 32
    %v727 = vpop.permute.xlu0 %726
    %729 = vrot.lane.b32.xlu0 %v678, 16
    %v730 = vpop.permute.xlu0 %729
    %v732 = vcombine.low %v676, %v693
    %v734 = vunpack.c.l.s4 1983009808
    %v735 = vunpack.c.0.s8 %v734
    %v736 = vlaneseq
    %v737 = vshrl.u32 %v736, 7
    %v738 = vsub.s32 %v735, %v737
    %v739 = vrot.slane %v732, %v738
    %v740 = vcombine.low %v690, %v696
    %v742 = vunpack.c.l.s4 1983009808
    %v743 = vunpack.c.0.s8 %v742
    %v744 = vlaneseq
    %v745 = vshrl.u32 %v744, 7
    %v746 = vsub.s32 %v743, %v745
    %v747 = vrot.slane %v740, %v746
    %v748 = vcombine.low %v699, %v705
    %v750 = vunpack.c.l.s4 1983009808
    %v751 = vunpack.c.0.s8 %v750
    %v752 = vlaneseq
    %v753 = vshrl.u32 %v752, 7
    %v754 = vsub.s32 %v751, %v753
    %v755 = vrot.slane %v748, %v754
    %v756 = vcombine.low %v702, %v708
    %v758 = vunpack.c.l.s4 1983009808
    %v759 = vunpack.c.0.s8 %v758
    %v760 = vlaneseq
    %v761 = vshrl.u32 %v760, 7
    %v762 = vsub.s32 %v759, %v761
    %v763 = vrot.slane %v756, %v762
    %v764 = vcombine.low %v739, %v747
    %v766 = vunpack.c.l.s4 1934713408
    %v767 = vunpack.c.0.s8 %v766
    %v768 = vlaneseq
    %v769 = vshrl.u32 %v768, 7
    %v770 = vsub.s32 %v767, %v769
    %v771 = vrot.slane %v764, %v770
    %v772 = vcombine.low %v755, %v763
    %v774 = vunpack.c.l.s4 1934713408
    %v775 = vunpack.c.0.s8 %v774
    %v776 = vlaneseq
    %v777 = vshrl.u32 %v776, 7
    %v778 = vsub.s32 %v775, %v777
    %v779 = vrot.slane %v772, %v778
    %v780 = vcombine.low %v771, %v779
    %v781 = vcombine.high %v771, %v779
    %v782 = vcombine.low %v678, %v715
    %v784 = vunpack.c.l.s4 1983009808
    %v785 = vunpack.c.0.s8 %v784
    %v786 = vlaneseq
    %v787 = vshrl.u32 %v786, 7
    %v788 = vsub.s32 %v785, %v787
    %v789 = vrot.slane %v782, %v788
    %v790 = vcombine.low %v712, %v718
    %v792 = vunpack.c.l.s4 1983009808
    %v793 = vunpack.c.0.s8 %v792
    %v794 = vlaneseq
    %v795 = vshrl.u32 %v794, 7
    %v796 = vsub.s32 %v793, %v795
    %v797 = vrot.slane %v790, %v796
    %v798 = vcombine.low %v721, %v727
    %v800 = vunpack.c.l.s4 1983009808
    %v801 = vunpack.c.0.s8 %v800
    %v802 = vlaneseq
    %v803 = vshrl.u32 %v802, 7
    %v804 = vsub.s32 %v801, %v803
    %v805 = vrot.slane %v798, %v804
    %v806 = vcombine.low %v724, %v730
    %v808 = vunpack.c.l.s4 1983009808
    %v809 = vunpack.c.0.s8 %v808
    %v810 = vlaneseq
    %v811 = vshrl.u32 %v810, 7
    %v812 = vsub.s32 %v809, %v811
    %v813 = vrot.slane %v806, %v812
    %v814 = vcombine.low %v789, %v797
    %v816 = vunpack.c.l.s4 1934713408
    %v817 = vunpack.c.0.s8 %v816
    %v818 = vlaneseq
    %v819 = vshrl.u32 %v818, 7
    %v820 = vsub.s32 %v817, %v819
    %v821 = vrot.slane %v814, %v820
    %v822 = vcombine.low %v805, %v813
    %v824 = vunpack.c.l.s4 1934713408
    %v825 = vunpack.c.0.s8 %v824
    %v826 = vlaneseq
    %v827 = vshrl.u32 %v826, 7
    %v828 = vsub.s32 %v825, %v827
    %v829 = vrot.slane %v822, %v828
    %v830 = vcombine.low %v821, %v829
    %v831 = vcombine.high %v821, %v829
    %vm832 = vcmask 130048
    %v833 = vsel %vm832, %v780, -inf
    %834 = vmax.xlane.f32.xlu0 %v833
    %v835 = vpop.xlane.xlu0 %834
    %v836 = vsel %vm832, %v830, -inf
    %837 = vmax.xlane.f32.xlu0 %v836
    %v838 = vpop.xlane.xlu0 %837
    %v839 = vsel %vm832, %v781, -inf
    %840 = vmax.xlane.f32.xlu0 %v839
    %v841 = vpop.xlane.xlu0 %840
    %v842 = vsel %vm832, %v831, -inf
    %843 = vmax.xlane.f32.xlu0 %v842
    %v844 = vpop.xlane.xlu0 %843
    %v849 = vlaneseq
    %v850 = vand.u32 %v849, 127
    %v851 = vlaneseq
    %v852 = vshrl.u32 %v851, 7
    %v853 = vsub.s32 %v850, %v852
    %v854 = vrot.slane %v835, %v853
    %v855 = vadd.s32 %v850, 4294967288
    %v856 = vlaneseq
    %v857 = vshrl.u32 %v856, 7
    %v858 = vsub.s32 %v855, %v857
    %v859 = vrot.slane %v838, %v858
    %vm860 = vcmask 130112
    %v861 = vsel %vm860, %v859, %v854
    %v862 = vlaneseq
    %v863 = vshrl.u32 %v862, 7
    %v864 = vsub.s32 %v850, %v863
    %v865 = vrot.slane %v841, %v864
    %v866 = vlaneseq
    %v867 = vshrl.u32 %v866, 7
    %v868 = vsub.s32 %v855, %v867
    %v869 = vrot.slane %v844, %v868
    %v870 = vsel %vm860, %v869, %v865
    %vm871 = vcmask 1041409
    %v872 = vsel %vm871, %v870, %v861
    %v873 = vsel %vm832, %v872, 0
    %875 = vmatprep.subr.mxu0 %v685
    %876 = vmatpush1.msra.mxu0 %v684
    %877 = vmatprep.subr.mxu0 %v687
    %878 = vmatpush1.msra.mxu0 %v686
    %879 = vmatprep.subr.mxu0 0.0
    %880 = vmatpush1.msra.mxu0 0.0
    %881 = vmatprep.subr.mxu0 0.0
    %882 = vmatpush1.msra.mxu0 0.0
    %883 = vmatprep.subr.mxu0 0.0
    %884 = vmatpush1.msra.mxu0 0.0
    %885 = vmatprep.subr.mxu0 0.0
    %886 = vmatpush1.msra.mxu0 0.0
    %887 = vmatprep.subr.mxu0 0.0
    %888 = vmatpush1.msra.mxu0 0.0
    %889 = vmatprep.subr.mxu0 0.0
    %890 = vmatpush1.msra.mxu0 0.0
    %891 = vmatprep.subr.mxu0 0.0
    %892 = vmatpush1.msra.mxu0 0.0
    %893 = vmatprep.subr.mxu0 0.0
    %894 = vmatpush1.msra.mxu0 0.0
    %895 = vmatprep.subr.mxu0 0.0
    %896 = vmatpush1.msra.mxu0 0.0
    %897 = vmatprep.subr.mxu0 0.0
    %898 = vmatpush1.msra.mxu0 0.0
    %899 = vmatprep.subr.mxu0 0.0
    %900 = vmatpush1.msra.mxu0 0.0
    %901 = vmatprep.subr.mxu0 0.0
    %902 = vmatpush1.msra.mxu0 0.0
    %903 = vmatprep.subr.mxu0 0.0
    %904 = vmatpush1.msra.mxu0 0.0
    %905 = vmatprep.subr.mxu0 0.0
    %906 = vmatpush1.msra.mxu0 0.0
    %907 = vmatprep.subr.mxu0 0.0
    %908 = vmatpush1.msra.mxu0 0.0
    %909 = vmatprep.subr.mxu0 0.0
    %910 = vmatpush1.msra.mxu0 0.0
    %911 = vmatprep.subr.mxu0 0.0
    %912 = vmatpush1.msra.mxu0 0.0
    %913 = vmatprep.subr.mxu0 0.0
    %914 = vmatpush1.msra.mxu0 0.0
    %915 = vmatprep.subr.mxu0 0.0
    %916 = vmatpush1.msra.mxu0 0.0
    %917 = vmatprep.subr.mxu0 0.0
    %918 = vmatpush1.msra.mxu0 0.0
    %919 = vmatprep.subr.mxu0 0.0
    %920 = vmatpush1.msra.mxu0 0.0
    %921 = vmatprep.subr.mxu0 0.0
    %922 = vmatpush1.msra.mxu0 0.0
    %923 = vmatprep.subr.mxu0 0.0
    %924 = vmatpush1.msra.mxu0 0.0
    %925 = vmatprep.subr.mxu0 0.0
    %926 = vmatpush1.msra.mxu0 0.0
    %927 = vmatprep.subr.mxu0 0.0
    %928 = vmatpush1.msra.mxu0 0.0
    %929 = vmatprep.subr.mxu0 0.0
    %930 = vmatpush1.msra.mxu0 0.0
    %931 = vmatprep.subr.mxu0 0.0
    %932 = vmatpush1.msra.mxu0 0.0
    %933 = vmatprep.subr.mxu0 0.0
    %934 = vmatpush1.msra.mxu0 0.0
    %935 = vmatprep.subr.mxu0 0.0
    %936 = vmatpush1.msra.mxu0 0.0
    %937 = vmatprep.subr.mxu0 0.0
    %938 = vmatpush1.msra.mxu0 0.0
    %939 = vmatprep.mubr.f32.mxu0 0.0
    %940 = vmatmul.mubr.f32.gmra.mrb[0].mxu0 %v873
    %v941 = vpop.f32.mrb[0].mxu0
    %v942 = vadd.f32 0.0, %v941
    %v943 = vpop.f32.mrb[0].mxu0
    %v944 = vadd.f32 0.0, %v943
    %945 = vdwg.mxu0
    %v946 = vsub.f32 %v676, %v942
    %v947 = vsub.f32 %v678, %v944
    %v948 = vmul.f32 %v946, 1.442695
    %v949 = vpow.pop %v948
    %v950 = vmul.f32 %v947, 1.442695
    %v951 = vpow.pop %v950
    %952 = vmatprep.subr.mxu0 %v685
    %953 = vmatpush1.xpose.msra.mxu0 %v684
    %954 = vmatprep.subr.mxu0 %v687
    %955 = vmatpush1.xpose.msra.mxu0 %v686
    %956 = vmatprep.subr.mxu0 0.0
    %957 = vmatpush1.xpose.msra.mxu0 0.0
    %958 = vmatprep.subr.mxu0 0.0
    %959 = vmatpush1.xpose.msra.mxu0 0.0
    %960 = vmatprep.subr.mxu0 0.0
    %961 = vmatpush1.xpose.msra.mxu0 0.0
    %962 = vmatprep.subr.mxu0 0.0
    %963 = vmatpush1.xpose.msra.mxu0 0.0
    %964 = vmatprep.subr.mxu0 0.0
    %965 = vmatpush1.xpose.msra.mxu0 0.0
    %966 = vmatprep.subr.mxu0 0.0
    %967 = vmatpush1.xpose.msra.mxu0 0.0
    %968 = vmatprep.subr.mxu0 0.0
    %969 = vmatpush1.xpose.msra.mxu0 0.0
    %970 = vmatprep.subr.mxu0 0.0
    %971 = vmatpush1.xpose.msra.mxu0 0.0
    %972 = vmatprep.subr.mxu0 0.0
    %973 = vmatpush1.xpose.msra.mxu0 0.0
    %974 = vmatprep.subr.mxu0 0.0
    %975 = vmatpush1.xpose.msra.mxu0 0.0
    %976 = vmatprep.subr.mxu0 0.0
    %977 = vmatpush1.xpose.msra.mxu0 0.0
    %978 = vmatprep.subr.mxu0 0.0
    %979 = vmatpush1.xpose.msra.mxu0 0.0
    %980 = vmatprep.subr.mxu0 0.0
    %981 = vmatpush1.xpose.msra.mxu0 0.0
    %982 = vmatprep.subr.mxu0 0.0
    %983 = vmatpush1.xpose.msra.mxu0 0.0
    %984 = vmatprep.subr.mxu0 0.0
    %985 = vmatpush1.xpose.msra.mxu0 0.0
    %986 = vmatprep.subr.mxu0 0.0
    %987 = vmatpush1.xpose.msra.mxu0 0.0
    %988 = vmatprep.subr.mxu0 0.0
    %989 = vmatpush1.xpose.msra.mxu0 0.0
    %990 = vmatprep.subr.mxu0 0.0
    %991 = vmatpush1.xpose.msra.mxu0 0.0
    %992 = vmatprep.subr.mxu0 0.0
    %993 = vmatpush1.xpose.msra.mxu0 0.0
    %994 = vmatprep.subr.mxu0 0.0
    %995 = vmatpush1.xpose.msra.mxu0 0.0
    %996 = vmatprep.subr.mxu0 0.0
    %997 = vmatpush1.xpose.msra.mxu0 0.0
    %998 = vmatprep.subr.mxu0 0.0
    %999 = vmatpush1.xpose.msra.mxu0 0.0
    %1000 = vmatprep.subr.mxu0 0.0
    %1001 = vmatpush1.xpose.msra.mxu0 0.0
    %1002 = vmatprep.subr.mxu0 0.0
    %1003 = vmatpush1.xpose.msra.mxu0 0.0
    %1004 = vmatprep.subr.mxu0 0.0
    %1005 = vmatpush1.xpose.msra.mxu0 0.0
    %1006 = vmatprep.subr.mxu0 0.0
    %1007 = vmatpush1.xpose.msra.mxu0 0.0
    %1008 = vmatprep.subr.mxu0 0.0
    %1009 = vmatpush1.xpose.msra.mxu0 0.0
    %1010 = vmatprep.subr.mxu0 0.0
    %1011 = vmatpush1.xpose.msra.mxu0 0.0
    %1012 = vmatprep.subr.mxu0 0.0
    %1013 = vmatpush1.xpose.msra.mxu0 0.0
    %1014 = vmatprep.subr.mxu0 0.0
    %1015 = vmatpush1.xpose.msra.mxu0 0.0
    %1016 = vmatprep.mubr.f32.mxu0 %v951
    %1017 = vmatmul.mubr.f32.gmra.mrb[0].mxu0 %v949
    %v1018 = vpop.f32.mrb[0].mxu0
    %v1019 = vadd.f32 0.0, %v1018
    %v1020 = vpop.f32.mrb[0].mxu0
    %1021 = vdwg.mxu0
    %v1022 = vrcp.pop %v1019
    %v1023 = vmul.f32 %v1019, %v1022
    %v1024 = vsub.f32 2.0, %v1023
    %v1025 = vmul.f32 %v1022, %v1024
    %v1027 = vsel %vm832, %v1025, 0
    %1029 = vmatprep.subr.mxu0 %v685
    %1030 = vmatpush1.msra.mxu0 %v684
    %1031 = vmatprep.subr.mxu0 %v687
    %1032 = vmatpush1.msra.mxu0 %v686
    %1033 = vmatprep.subr.mxu0 0.0
    %1034 = vmatpush1.msra.mxu0 0.0
    %1035 = vmatprep.subr.mxu0 0.0
    %1036 = vmatpush1.msra.mxu0 0.0
    %1037 = vmatprep.subr.mxu0 0.0
    %1038 = vmatpush1.msra.mxu0 0.0
    %1039 = vmatprep.subr.mxu0 0.0
    %1040 = vmatpush1.msra.mxu0 0.0
    %1041 = vmatprep.subr.mxu0 0.0
    %1042 = vmatpush1.msra.mxu0 0.0
    %1043 = vmatprep.subr.mxu0 0.0
    %1044 = vmatpush1.msra.mxu0 0.0
    %1045 = vmatprep.subr.mxu0 0.0
    %1046 = vmatpush1.msra.mxu0 0.0
    %1047 = vmatprep.subr.mxu0 0.0
    %1048 = vmatpush1.msra.mxu0 0.0
    %1049 = vmatprep.subr.mxu0 0.0
    %1050 = vmatpush1.msra.mxu0 0.0
    %1051 = vmatprep.subr.mxu0 0.0
    %1052 = vmatpush1.msra.mxu0 0.0
    %1053 = vmatprep.subr.mxu0 0.0
    %1054 = vmatpush1.msra.mxu0 0.0
    %1055 = vmatprep.subr.mxu0 0.0
    %1056 = vmatpush1.msra.mxu0 0.0
    %1057 = vmatprep.subr.mxu0 0.0
    %1058 = vmatpush1.msra.mxu0 0.0
    %1059 = vmatprep.subr.mxu0 0.0
    %1060 = vmatpush1.msra.mxu0 0.0
    %1061 = vmatprep.subr.mxu0 0.0
    %1062 = vmatpush1.msra.mxu0 0.0
    %1063 = vmatprep.subr.mxu0 0.0
    %1064 = vmatpush1.msra.mxu0 0.0
    %1065 = vmatprep.subr.mxu0 0.0
    %1066 = vmatpush1.msra.mxu0 0.0
    %1067 = vmatprep.subr.mxu0 0.0
    %1068 = vmatpush1.msra.mxu0 0.0
    %1069 = vmatprep.subr.mxu0 0.0
    %1070 = vmatpush1.msra.mxu0 0.0
    %1071 = vmatprep.subr.mxu0 0.0
    %1072 = vmatpush1.msra.mxu0 0.0
    %1073 = vmatprep.subr.mxu0 0.0
    %1074 = vmatpush1.msra.mxu0 0.0
    %1075 = vmatprep.subr.mxu0 0.0
    %1076 = vmatpush1.msra.mxu0 0.0
    %1077 = vmatprep.subr.mxu0 0.0
    %1078 = vmatpush1.msra.mxu0 0.0
    %1079 = vmatprep.subr.mxu0 0.0
    %1080 = vmatpush1.msra.mxu0 0.0
    %1081 = vmatprep.subr.mxu0 0.0
    %1082 = vmatpush1.msra.mxu0 0.0
    %1083 = vmatprep.subr.mxu0 0.0
    %1084 = vmatpush1.msra.mxu0 0.0
    %1085 = vmatprep.subr.mxu0 0.0
    %1086 = vmatpush1.msra.mxu0 0.0
    %1087 = vmatprep.subr.mxu0 0.0
    %1088 = vmatpush1.msra.mxu0 0.0
    %1089 = vmatprep.subr.mxu0 0.0
    %1090 = vmatpush1.msra.mxu0 0.0
    %1091 = vmatprep.subr.mxu0 0.0
    %1092 = vmatpush1.msra.mxu0 0.0
    %1093 = vmatprep.mubr.f32.mxu0 0.0
    %1094 = vmatmul.mubr.f32.gmra.mrb[0].mxu0 %v1027
    %v1095 = vpop.f32.mrb[0].mxu0
    %v1096 = vadd.f32 0.0, %v1095
    %v1097 = vpop.f32.mrb[0].mxu0
    %v1098 = vadd.f32 0.0, %v1097
    %1099 = vdwg.mxu0
    %v1100 = vmul.f32 %v949, %v1096
    %v1101 = vmul.f32 %v951, %v1098
    %v1104 = vcombine.low %v1100, %v1101
    %v1106 = vunpack.c.l.s4 1983009808
    %v1107 = vunpack.c.0.s8 %v1106
    %v1108 = vlaneseq
    %v1109 = vshrl.u32 %v1108, 7
    %v1110 = vsub.s32 %v1107, %v1109
    %v1111 = vrot.slane %v1104, %v1110
    %1113 = vst [vmem:[#allocation13] sm:$0xf] %v1111
    // Predicated region
    $region74: #{tpu_custom_call.1} parent=1 // pred_check
      _
    $region75: #{tpu_custom_call.1} parent=1 // pred_check_branch
      %1115 = sbr.rel (0) target = $region77
    $region76: #{tpu_custom_call.1} parent=1 // pred_region
      %s1117 = ssub.s32 64, 64
      %1118 = vsyncadd [#allocation4], %s1117
      %s1120 = sshll.u32 [#allocation13], 4
      %s1121 = int_to_ptr.vmem [resolvable:$true] %s1120
      %1123 = dma.vmem_to_hbm [thread:$0]  %s1121, 64, %s12, [#allocation4]
    $region77: #{tpu_custom_call.1} parent=1 // pred_fallthru
      _
    // Predicated region
    $region78: #{tpu_custom_call.1} parent=1 // pred_check
      _
    $region79: #{tpu_custom_call.1} parent=1 // pred_check_branch
      %1125 = sbr.rel (0) target = $region81
    $region80: #{tpu_custom_call.1} parent=1 // pred_region
      %1126 = dma.done [#allocation4], 64
    $region81: #{tpu_custom_call.1} parent=1 // pred_fallthru
      _
    %1127 = vsyncpa [#allocation3], 1
    %1128 = vsyncpa [#allocation6], 1
    %1129 = vsyncpa [#allocation9], 1
    %1130 = vsyncpa [#allocation12], 1
    %1131 = vsyncpa [#allocation4], 1

</llo_original>
